<compile_context>
chip_gen: v6e
topology: v6e:2x2x1
jax: 0.10.0
libtpu: 0.0.40
codegen_flags: <defaults>
</compile_context>

<pallas_src>
import jax
import jax.numpy as jnp
from jax import lax
from jax.experimental import pallas as pl
from jax.experimental.pallas import tpu as pltpu


# ----------------------------------------------------------------------------
# Fused Pallas kernel
# ----------------------------------------------------------------------------
def bilstm_head_kernel(seq_len_ref, ls_ref, le_ref, rs_ref, re_ref,
                       x_ref, wi_ref, bi_ref, whbd_ref,
                       w1_ref, b1_ref, w2_ref, b2_ref,
                       logits_ref, prob_ref):
    """Fused BiLSTM + target gather + classification head.

    seq_len/ls/le/rs/re : (Bp, 1) int32   lengths and gather indices (padded)
    x_ref               : (T*Bp, D)       time-major flattened embeddings
                                          (f32 or bf16)
    wi_ref              : (D, 8H)         [W_ih_fwd | W_ih_bwd], gate order
                                          (i, f, o, g) per direction
    bi_ref              : (1, 8H) f32     fused input+hidden biases
    whbd_ref            : (2H, 8H) f32    block-diag [[Whf, 0], [0, Whb]]
    w1/b1/w2/b2         : head weights    (4H,H)/(1,H)/(H,C)/(1,C)
    logits_ref/prob_ref : (Bp, C)         outputs
    """
    Bp = seq_len_ref.shape[0]
    TB, _ = x_ref.shape
    T = TB // Bp
    H = whbd_ref.shape[0] // 2
    H3, H4 = 3 * H, 4 * H

    # ---- (1) hoisted input projection: ONE (T*Bp, D) x (D, 8H) GEMM ---------
    # Result stays in vregs (no VMEM scratch roundtrip); f32 accumulation.
    gx = jnp.dot(x_ref[...], wi_ref[...],
                 preferred_element_type=jnp.float32) + bi_ref[...]

    wh_bd = whbd_ref[...]
    seq_len = seq_len_ref[...]          # (Bp, 1) int32
    l_start = ls_ref[...]
    l_end = le_ref[...]
    r_start = rs_ref[...]
    r_end = re_ref[...]

    def sigmoid(v):
        # EUP tanh instead of exp + VPU divide on the recurrence critical path.
        return 0.5 * (jnp.tanh(0.5 * v) + 1.0)

    zeros_bh = jnp.zeros((Bp, H), jnp.float32)
    h_f = c_f = h_b = c_b = zeros_bh
    ltar_f = ltar_b = rtar_f = rtar_b = zeros_bh

    # ---- (2) fused fwd+bwd recurrence, fully unrolled (T static & small) ----
    # TODO(synk): for large T switch to lax.fori_loop(..., unroll=4) with a
    # T-chunked grid instead of full unroll.
    for t in range(T):
        u = T - 1 - t

        # Per-step pre-activations: fwd half of row-block t, bwd half of
        # row-block u.  Both 4H=128-lane aligned slices -> cheap concat.
        gx_f = gx[t * Bp:(t + 1) * Bp, :H4]
        gx_b = gx[u * Bp:(u + 1) * Bp, H4:]

        # ONE block-diagonal recurrent dot per step: (Bp,2H) x (2H,8H).
        gates = jnp.concatenate([gx_f, gx_b], axis=1) + jnp.dot(
            jnp.concatenate([h_f, h_b], axis=1), wh_bd,
            preferred_element_type=jnp.float32)

        # Gate layout (i, f, o, g) per direction: one wide sigmoid per dir.
        sf = sigmoid(gates[:, :H3])
        gf = jnp.tanh(gates[:, H3:H4])
        sb = sigmoid(gates[:, H4:H4 + H3])
        gb = jnp.tanh(gates[:, H4 + H3:])

        cf_new = sf[:, H:2 * H] * c_f + sf[:, :H] * gf
        hf_new = sf[:, 2 * H:H3] * jnp.tanh(cf_new)
        cb_new = sb[:, H:2 * H] * c_b + sb[:, :H] * gb
        hb_new = sb[:, 2 * H:H3] * jnp.tanh(cb_new)

        valid_f = t < seq_len            # (Bp, 1) bool
        valid_b = u < seq_len
        h_f = jnp.where(valid_f, hf_new, h_f)
        c_f = jnp.where(valid_f, cf_new, c_f)
        h_b = jnp.where(valid_b, hb_new, h_b)
        c_b = jnp.where(valid_b, cb_new, c_b)

        # In-kernel gather of the 4 target vectors; validity folded into the
        # select (padded positions contribute 0, matching pad_packed_sequence).
        ltar_b = jnp.where(valid_f & (l_start == t), hf_new, ltar_b)
        rtar_b = jnp.where(valid_f & (r_start == t), hf_new, rtar_b)
        ltar_f = jnp.where(valid_b & (l_end == u), hb_new, ltar_f)
        rtar_f = jnp.where(valid_b & (r_end == u), hb_new, rtar_f)

    # ---- (3) fused classification head: linear1 -> tanh -> linear2 -> softmax
    tar = jnp.concatenate([ltar_f, ltar_b, rtar_f, rtar_b], axis=1)   # (Bp, 4H)
    h1 = jnp.tanh(jnp.dot(tar, w1_ref[...],
                          preferred_element_type=jnp.float32) + b1_ref[...])
    logits = jnp.dot(h1, w2_ref[...],
                     preferred_element_type=jnp.float32) + b2_ref[...]
    logits_ref[...] = logits

    z = logits - jnp.max(logits, axis=1, keepdims=True)
    e = jnp.exp(z)
    s = jnp.sum(e, axis=1, keepdims=True)
    r = pl.reciprocal(s, approx=True)
    r = r * (2.0 - s * r)                # one Newton step -> ~1e-7 relative
    prob_ref[...] = e * r


# ----------------------------------------------------------------------------
# Wrapper around pallas_call
# ----------------------------------------------------------------------------
_VMEM = pl.BlockSpec(memory_space=pltpu.MemorySpace.VMEM)


def run_bilstm_head(x_tbd, seq_lens, lidx_start, lidx_end, ridx_start,
                    ridx_end, kp, use_bf16_mxu=False):
    T, B, D = x_tbd.shape
    C = kp["w2"].shape[1]

    # Pad batch to a multiple of 8 (f32 sublane count) so every (B, *) tensor
    # fills whole vregs; padded rows have seq_len=0 and are sliced off below.
    Bp = max(8, ((B + 7) // 8) * 8)
    pad = Bp - B
    if pad:
        x_tbd = jnp.pad(x_tbd, ((0, 0), (0, pad), (0, 0)))

    # Time-major flatten done in XLA (fuses with the (B,T,D)->(T,B,D)
    # transpose) so the kernel never reshapes / relays out x.
    x2d = x_tbd.reshape(T * Bp, D)
    wi = kp["wi_all"]
    if use_bf16_mxu:
        x2d = x2d.astype(jnp.bfloat16)
        wi = wi.astype(jnp.bfloat16)

    def col(v):
        v = v.astype(jnp.int32).reshape(B, 1)
        if pad:
            v = jnp.pad(v, ((0, pad), (0, 0)))
        return v

    logits, prob = pl.pallas_call(
        bilstm_head_kernel,
        out_shape=(jax.ShapeDtypeStruct((Bp, C), jnp.float32),
                   jax.ShapeDtypeStruct((Bp, C), jnp.float32)),
        in_specs=[_VMEM] * 13,
        out_specs=(_VMEM, _VMEM),
        compiler_params=pltpu.CompilerParams(
            vmem_limit_bytes=32 * 1024 * 1024),
    )(col(seq_lens), col(lidx_start), col(lidx_end), col(ridx_start),
      col(ridx_end),
      x2d, wi, kp["bi_all"], kp["wh_bd"],
      kp["w1"], kp["b1"], kp["w2"], kp["b2"])
    return logits[:B], prob[:B]


# ----------------------------------------------------------------------------
# Parameter preparation: gate reorder (i,f,g,o) -> (i,f,o,g), fuse directions,
# build block-diagonal recurrent weight.
# ----------------------------------------------------------------------------
def _gate_permute(w, H):
    # PyTorch gate order (i, f, g, o) -> kernel order (i, f, o, g)
    return jnp.concatenate([w[..., :2 * H], w[..., 3 * H:4 * H],
                            w[..., 2 * H:3 * H]], axis=-1)


def prepare_kernel_params(params):
    H = params["whf"].shape[0]
    wif = _gate_permute(params["wif"], H)
    wib = _gate_permute(params["wib"], H)
    bf = _gate_permute(params["bf"], H)
    bb = _gate_permute(params["bb"], H)
    whf = _gate_permute(params["whf"], H)
    whb = _gate_permute(params["whb"], H)
    wh_bd = jnp.zeros((2 * H, 8 * H), jnp.float32)
    wh_bd = wh_bd.at[:H, :4 * H].set(whf).at[H:, 4 * H:].set(whb)
    return dict(
        wi_all=jnp.concatenate([wif, wib], axis=1),      # (D, 8H)
        bi_all=jnp.concatenate([bf, bb], axis=1),        # (1, 8H)
        wh_bd=wh_bd,                                     # (2H, 8H) block-diag
        w1=params["w1"], b1=params["b1"],
        w2=params["w2"], b2=params["b2"])


# ----------------------------------------------------------------------------
# Full forward (plain-JAX glue: embedding lookups, transpose)
# ----------------------------------------------------------------------------
def bilstm_forward(params, seq_lens, word_idx, pos_idx,
                   lidx_start, lidx_end, ridx_start, ridx_end,
                   use_bf16_mxu=False):
    # emb(sent[0]) and emb_pos(sent[1]); dropout is identity (eval mode)
    emb = params["emb"][word_idx]        # (B, T, E)
    pos = params["emb_pos"][pos_idx]     # (B, T, P)
    inputs = jnp.concatenate([emb, pos], axis=2)            # (B, T, D)
    x_tbd = jnp.transpose(inputs, (1, 0, 2))                # (T, B, D) time-major

    kp = prepare_kernel_params(params)   # in production: pre-permute offline
    return run_bilstm_head(x_tbd, seq_lens, lidx_start, lidx_end,
                           ridx_start, ridx_end, kp,
                           use_bf16_mxu=use_bf16_mxu)


# ----------------------------------------------------------------------------
# Pure-JAX reference (PyTorch gate order / semantics) for verification
# ----------------------------------------------------------------------------
def reference_forward(params, seq_lens, word_idx, pos_idx,
                      lidx_start, lidx_end, ridx_start, ridx_end):
    emb = params["emb"][word_idx]
    pos = params["emb_pos"][pos_idx]
    inputs = jnp.concatenate([emb, pos], axis=2)
    B, T, _ = inputs.shape
    H = params["whf"].shape[0]
    x_tbd = jnp.transpose(inputs, (1, 0, 2))
    mask = (jnp.arange(T)[:, None] < seq_lens[None, :]).astype(jnp.float32)[:, :, None]

    def run_dir(xs, ms, wi, wh, b):
        def step(carry, inp):
            h, c = carry
            x_t, m = inp
            gates = x_t @ wi + h @ wh + b
            i = jax.nn.sigmoid(gates[:, :H])
            f = jax.nn.sigmoid(gates[:, H:2 * H])
            g = jnp.tanh(gates[:, 2 * H:3 * H])
            o = jax.nn.sigmoid(gates[:, 3 * H:])
            c_new = f * c + i * g
            h_new = o * jnp.tanh(c_new)
            out = m * h_new
            h = m * h_new + (1.0 - m) * h
            c = m * c_new + (1.0 - m) * c
            return (h, c), out
        init = (jnp.zeros((B, H)), jnp.zeros((B, H)))
        _, outs = lax.scan(step, init, (xs, ms))
        return outs

    out_f = jnp.transpose(run_dir(x_tbd, mask, params["wif"], params["whf"],
                                  params["bf"]), (1, 0, 2))
    out_b_rev = run_dir(x_tbd[::-1], mask[::-1], params["wib"], params["whb"],
                        params["bb"])
    out_b = jnp.transpose(out_b_rev[::-1], (1, 0, 2))

    batch = jnp.arange(B)
    tar = jnp.concatenate([out_b[batch, lidx_end], out_f[batch, lidx_start],
                           out_b[batch, ridx_end], out_f[batch, ridx_start]], axis=1)
    h = jnp.tanh(tar @ params["w1"] + params["b1"])
    logits = h @ params["w2"] + params["b2"]
    prob = jax.nn.softmax(logits, axis=1)
    return logits, prob


# ----------------------------------------------------------------------------
# Deterministic parameter init (shapes match the module's __init__)
# ----------------------------------------------------------------------------
def init_params(key, num_words, embed_size, num_pos_tags, hid, num_classes):
    ks = jax.random.split(key, 12)
    u = lambda k, shape: jax.random.uniform(k, shape, jnp.float32, -0.1, 0.1)
    D = embed_size + num_pos_tags

    emb = u(ks[0], (num_words, embed_size)).at[0].set(0.0)            # padding_idx=0
    emb_pos = u(ks[1], (num_pos_tags, num_pos_tags)).at[37].set(0.0)  # padding_idx=37

    # nn.LSTM weights (transposed for right-multiplication), biases fused.
    # Gate order here is PyTorch's (i, f, g, o); the kernel prep re-permutes.
    wif = u(ks[2], (D, 4 * hid))
    whf = u(ks[3], (hid, 4 * hid))
    bf = u(ks[4], (1, 4 * hid)) + u(ks[5], (1, 4 * hid))
    wib = u(ks[6], (D, 4 * hid))
    whb = u(ks[7], (hid, 4 * hid))
    bb = u(ks[8], (1, 4 * hid)) + u(ks[9], (1, 4 * hid))

    w1 = u(ks[10], (4 * hid, hid))
    b1 = jnp.zeros((1, hid), jnp.float32)
    w2 = u(ks[11], (hid, num_classes))
    b2 = jnp.zeros((1, num_classes), jnp.float32)

    return dict(emb=emb, emb_pos=emb_pos,
                wif=wif, whf=whf, bf=bf, wib=wib, whb=whb, bb=bb,
                w1=w1, b1=b1, w2=w2, b2=b2)


if __name__ == "__main__":
    # Small shapes: batch=2 (padded to 8 inside the wrapper), seq=8, embed=32,
    # pos_tags=40, hid=32 (4H=128 / 8H=256 lane-aligned), num_classes=4.
    B, T = 2, 8
    NUM_WORDS, EMBED, NUM_POS, HID, NUM_CLASSES = 100, 32, 40, 32, 4

    key = jax.random.PRNGKey(0)
    kp_, kw, kpos = jax.random.split(key, 3)
    params = init_params(kp_, NUM_WORDS, EMBED, NUM_POS, HID, NUM_CLASSES)

    word_idx = jax.random.randint(kw, (B, T), 1, NUM_WORDS, dtype=jnp.int32)
    pos_idx = jax.random.randint(kpos, (B, T), 0, NUM_POS - 2, dtype=jnp.int32)
    seq_lens = jnp.array([8, 5], dtype=jnp.int32)
    lidx_start = jnp.array([1, 0], dtype=jnp.int32)
    lidx_end = jnp.array([2, 1], dtype=jnp.int32)
    ridx_start = jnp.array([5, 3], dtype=jnp.int32)
    ridx_end = jnp.array([6, 4], dtype=jnp.int32)

    fwd = jax.jit(bilstm_forward, static_argnames=("use_bf16_mxu",))

    # f32 MXU path (strict tolerance)
    logits, prob = fwd(params, seq_lens, word_idx, pos_idx,
                       lidx_start, lidx_end, ridx_start, ridx_end,
                       use_bf16_mxu=False)
    jax.block_until_ready((logits, prob))

    ref_logits, ref_prob = reference_forward(
        params, seq_lens, word_idx, pos_idx,
        lidx_start, lidx_end, ridx_start, ridx_end)

    assert logits.shape == (B, NUM_CLASSES) and prob.shape == (B, NUM_CLASSES)
    assert jnp.allclose(logits, ref_logits, atol=1e-4, rtol=1e-4)
    assert jnp.allclose(prob, ref_prob, atol=1e-4, rtol=1e-4)
    assert jnp.allclose(jnp.sum(prob, axis=1), 1.0, atol=1e-5)

    # bf16-MXU projection path (looser tolerance; state/gate math stays f32)
    logits_bf, prob_bf = fwd(params, seq_lens, word_idx, pos_idx,
                             lidx_start, lidx_end, ridx_start, ridx_end,
                             use_bf16_mxu=True)
    jax.block_until_ready((logits_bf, prob_bf))
    assert jnp.allclose(logits_bf, ref_logits, atol=1e-2, rtol=1e-2)
    assert jnp.allclose(prob_bf, ref_prob, atol=1e-2, rtol=1e-2)
    assert jnp.allclose(jnp.sum(prob_bf, axis=1), 1.0, atol=1e-5)

    print("KERNEL_OK")
</pallas_src>

<mosaic_0001>
module attributes {stable_mosaic.version = 11 : i64} {
  func.func @bilstm_head_kernel(%arg0: memref<8x1xi32, #tpu.memory_space<vmem>>, %arg1: memref<8x1xi32, #tpu.memory_space<vmem>>, %arg2: memref<8x1xi32, #tpu.memory_space<vmem>>, %arg3: memref<8x1xi32, #tpu.memory_space<vmem>>, %arg4: memref<8x1xi32, #tpu.memory_space<vmem>>, %arg5: memref<64x72xf32, #tpu.memory_space<vmem>>, %arg6: memref<72x256xf32, #tpu.memory_space<vmem>>, %arg7: memref<1x256xf32, #tpu.memory_space<vmem>>, %arg8: memref<64x256xf32, #tpu.memory_space<vmem>>, %arg9: memref<128x32xf32, #tpu.memory_space<vmem>>, %arg10: memref<1x32xf32, #tpu.memory_space<vmem>>, %arg11: memref<32x4xf32, #tpu.memory_space<vmem>>, %arg12: memref<1x4xf32, #tpu.memory_space<vmem>>, %arg13: memref<8x4xf32, #tpu.memory_space<vmem>>, %arg14: memref<8x4xf32, #tpu.memory_space<vmem>>) attributes {dimension_semantics = [], scalar_prefetch = 0 : i64, scratch_operands = 0 : i64, tpu.core_type = #tpu.core_type<tc>} {
    %c0 = arith.constant 0 : index
    %c0_0 = arith.constant 0 : index
    %0 = vector.load %arg5[%c0, %c0_0] : memref<64x72xf32, #tpu.memory_space<vmem>>, vector<64x72xf32>
    %c0_1 = arith.constant 0 : index
    %c0_2 = arith.constant 0 : index
    %1 = vector.load %arg6[%c0_1, %c0_2] : memref<72x256xf32, #tpu.memory_space<vmem>>, vector<72x256xf32>
    %cst = arith.constant dense<0.000000e+00> : vector<64x256xf32>
    %2 = tpu.matmul %0, %1, %cst {dimension_numbers = #tpu.dot_dimension_numbers<[1], [0], [0], [1], [0, 0, 1, 1], [], []>} : vector<64x72xf32>, vector<72x256xf32>, vector<64x256xf32> -> vector<64x256xf32>
    %c0_3 = arith.constant 0 : index
    %c0_4 = arith.constant 0 : index
    %3 = vector.load %arg7[%c0_3, %c0_4] : memref<1x256xf32, #tpu.memory_space<vmem>>, vector<1x256xf32>
    %4 = vector.broadcast %3 : vector<1x256xf32> to vector<64x256xf32>
    %5 = arith.addf %2, %4 : vector<64x256xf32>
    %c0_5 = arith.constant 0 : index
    %c0_6 = arith.constant 0 : index
    %6 = vector.load %arg8[%c0_5, %c0_6] : memref<64x256xf32, #tpu.memory_space<vmem>>, vector<64x256xf32>
    %c0_7 = arith.constant 0 : index
    %c0_8 = arith.constant 0 : index
    %7 = vector.load %arg0[%c0_7, %c0_8] : memref<8x1xi32, #tpu.memory_space<vmem>>, vector<8x1xi32>
    %c0_9 = arith.constant 0 : index
    %c0_10 = arith.constant 0 : index
    %8 = vector.load %arg1[%c0_9, %c0_10] : memref<8x1xi32, #tpu.memory_space<vmem>>, vector<8x1xi32>
    %c0_11 = arith.constant 0 : index
    %c0_12 = arith.constant 0 : index
    %9 = vector.load %arg2[%c0_11, %c0_12] : memref<8x1xi32, #tpu.memory_space<vmem>>, vector<8x1xi32>
    %c0_13 = arith.constant 0 : index
    %c0_14 = arith.constant 0 : index
    %10 = vector.load %arg3[%c0_13, %c0_14] : memref<8x1xi32, #tpu.memory_space<vmem>>, vector<8x1xi32>
    %c0_15 = arith.constant 0 : index
    %c0_16 = arith.constant 0 : index
    %11 = vector.load %arg4[%c0_15, %c0_16] : memref<8x1xi32, #tpu.memory_space<vmem>>, vector<8x1xi32>
    %cst_17 = arith.constant 0.000000e+00 : f32
    %12 = vector.broadcast %cst_17 : f32 to vector<8x32xf32>
    %13 = vector.extract_strided_slice %5 {offsets = [0, 0], sizes = [8, 128], strides = [1, 1]} : vector<64x256xf32> to vector<8x128xf32>
    %14 = vector.extract_strided_slice %5 {offsets = [56, 128], sizes = [8, 128], strides = [1, 1]} : vector<64x256xf32> to vector<8x128xf32>
    %15 = tpu.concatenate %13, %14 in 1 : vector<8x128xf32>, vector<8x128xf32> -> vector<8x256xf32>
    %16 = tpu.concatenate %12, %12 in 1 : vector<8x32xf32>, vector<8x32xf32> -> vector<8x64xf32>
    %cst_18 = arith.constant dense<0.000000e+00> : vector<8x256xf32>
    %17 = tpu.matmul %16, %6, %cst_18 {dimension_numbers = #tpu.dot_dimension_numbers<[1], [0], [0], [1], [0, 0, 1, 1], [], []>} : vector<8x64xf32>, vector<64x256xf32>, vector<8x256xf32> -> vector<8x256xf32>
    %18 = arith.addf %15, %17 : vector<8x256xf32>
    %19 = vector.extract_strided_slice %18 {offsets = [0, 0], sizes = [8, 96], strides = [1, 1]} : vector<8x256xf32> to vector<8x96xf32>
    %cst_19 = arith.constant 5.000000e-01 : f32
    %20 = vector.broadcast %cst_19 : f32 to vector<8x96xf32>
    %21 = arith.mulf %20, %19 : vector<8x96xf32>
    %22 = math.tanh %21 : vector<8x96xf32>
    %cst_20 = arith.constant 1.000000e+00 : f32
    %23 = vector.broadcast %cst_20 : f32 to vector<8x96xf32>
    %24 = arith.addf %22, %23 : vector<8x96xf32>
    %cst_21 = arith.constant 5.000000e-01 : f32
    %25 = vector.broadcast %cst_21 : f32 to vector<8x96xf32>
    %26 = arith.mulf %25, %24 : vector<8x96xf32>
    %27 = vector.extract_strided_slice %18 {offsets = [0, 96], sizes = [8, 32], strides = [1, 1]} : vector<8x256xf32> to vector<8x32xf32>
    %28 = math.tanh %27 : vector<8x32xf32>
    %29 = vector.extract_strided_slice %18 {offsets = [0, 128], sizes = [8, 96], strides = [1, 1]} : vector<8x256xf32> to vector<8x96xf32>
    %cst_22 = arith.constant 5.000000e-01 : f32
    %30 = vector.broadcast %cst_22 : f32 to vector<8x96xf32>
    %31 = arith.mulf %30, %29 : vector<8x96xf32>
    %32 = math.tanh %31 : vector<8x96xf32>
    %cst_23 = arith.constant 1.000000e+00 : f32
    %33 = vector.broadcast %cst_23 : f32 to vector<8x96xf32>
    %34 = arith.addf %32, %33 : vector<8x96xf32>
    %cst_24 = arith.constant 5.000000e-01 : f32
    %35 = vector.broadcast %cst_24 : f32 to vector<8x96xf32>
    %36 = arith.mulf %35, %34 : vector<8x96xf32>
    %37 = vector.extract_strided_slice %18 {offsets = [0, 224], sizes = [8, 32], strides = [1, 1]} : vector<8x256xf32> to vector<8x32xf32>
    %38 = math.tanh %37 : vector<8x32xf32>
    %39 = vector.extract_strided_slice %26 {offsets = [0, 32], sizes = [8, 32], strides = [1, 1]} : vector<8x96xf32> to vector<8x32xf32>
    %40 = arith.mulf %39, %12 : vector<8x32xf32>
    %41 = vector.extract_strided_slice %26 {offsets = [0, 0], sizes = [8, 32], strides = [1, 1]} : vector<8x96xf32> to vector<8x32xf32>
    %42 = arith.mulf %41, %28 : vector<8x32xf32>
    %43 = arith.addf %40, %42 : vector<8x32xf32>
    %44 = vector.extract_strided_slice %26 {offsets = [0, 64], sizes = [8, 32], strides = [1, 1]} : vector<8x96xf32> to vector<8x32xf32>
    %45 = math.tanh %43 : vector<8x32xf32>
    %46 = arith.mulf %44, %45 : vector<8x32xf32>
    %47 = vector.extract_strided_slice %36 {offsets = [0, 32], sizes = [8, 32], strides = [1, 1]} : vector<8x96xf32> to vector<8x32xf32>
    %48 = arith.mulf %47, %12 : vector<8x32xf32>
    %49 = vector.extract_strided_slice %36 {offsets = [0, 0], sizes = [8, 32], strides = [1, 1]} : vector<8x96xf32> to vector<8x32xf32>
    %50 = arith.mulf %49, %38 : vector<8x32xf32>
    %51 = arith.addf %48, %50 : vector<8x32xf32>
    %52 = vector.extract_strided_slice %36 {offsets = [0, 64], sizes = [8, 32], strides = [1, 1]} : vector<8x96xf32> to vector<8x32xf32>
    %53 = math.tanh %51 : vector<8x32xf32>
    %54 = arith.mulf %52, %53 : vector<8x32xf32>
    %c0_i32 = arith.constant 0 : i32
    %55 = vector.broadcast %c0_i32 : i32 to vector<8x1xi32>
    %56 = arith.cmpi sgt, %7, %55 : vector<8x1xi32>
    %c7_i32 = arith.constant 7 : i32
    %57 = vector.broadcast %c7_i32 : i32 to vector<8x1xi32>
    %58 = arith.cmpi sgt, %7, %57 : vector<8x1xi32>
    %59 = vector.shape_cast %56 : vector<8x1xi1> to vector<8x1xi1>
    %60 = vector.broadcast %59 : vector<8x1xi1> to vector<8x32xi1>
    %61 = arith.select %60, %46, %12 : vector<8x32xi1>, vector<8x32xf32>
    %62 = vector.shape_cast %56 : vector<8x1xi1> to vector<8x1xi1>
    %63 = vector.broadcast %62 : vector<8x1xi1> to vector<8x32xi1>
    %64 = arith.select %63, %43, %12 : vector<8x32xi1>, vector<8x32xf32>
    %65 = vector.shape_cast %58 : vector<8x1xi1> to vector<8x1xi1>
    %66 = vector.broadcast %65 : vector<8x1xi1> to vector<8x32xi1>
    %67 = arith.select %66, %54, %12 : vector<8x32xi1>, vector<8x32xf32>
    %68 = vector.shape_cast %58 : vector<8x1xi1> to vector<8x1xi1>
    %69 = vector.broadcast %68 : vector<8x1xi1> to vector<8x32xi1>
    %70 = arith.select %69, %51, %12 : vector<8x32xi1>, vector<8x32xf32>
    %c0_i32_25 = arith.constant 0 : i32
    %71 = vector.broadcast %c0_i32_25 : i32 to vector<8x1xi32>
    %72 = arith.cmpi eq, %8, %71 : vector<8x1xi32>
    %73 = arith.andi %56, %72 : vector<8x1xi1>
    %74 = vector.shape_cast %73 : vector<8x1xi1> to vector<8x1xi1>
    %75 = vector.broadcast %74 : vector<8x1xi1> to vector<8x32xi1>
    %76 = arith.select %75, %46, %12 : vector<8x32xi1>, vector<8x32xf32>
    %c0_i32_26 = arith.constant 0 : i32
    %77 = vector.broadcast %c0_i32_26 : i32 to vector<8x1xi32>
    %78 = arith.cmpi eq, %10, %77 : vector<8x1xi32>
    %79 = arith.andi %56, %78 : vector<8x1xi1>
    %80 = vector.shape_cast %79 : vector<8x1xi1> to vector<8x1xi1>
    %81 = vector.broadcast %80 : vector<8x1xi1> to vector<8x32xi1>
    %82 = arith.select %81, %46, %12 : vector<8x32xi1>, vector<8x32xf32>
    %c7_i32_27 = arith.constant 7 : i32
    %83 = vector.broadcast %c7_i32_27 : i32 to vector<8x1xi32>
    %84 = arith.cmpi eq, %9, %83 : vector<8x1xi32>
    %85 = arith.andi %58, %84 : vector<8x1xi1>
    %86 = vector.shape_cast %85 : vector<8x1xi1> to vector<8x1xi1>
    %87 = vector.broadcast %86 : vector<8x1xi1> to vector<8x32xi1>
    %88 = arith.select %87, %54, %12 : vector<8x32xi1>, vector<8x32xf32>
    %c7_i32_28 = arith.constant 7 : i32
    %89 = vector.broadcast %c7_i32_28 : i32 to vector<8x1xi32>
    %90 = arith.cmpi eq, %11, %89 : vector<8x1xi32>
    %91 = arith.andi %58, %90 : vector<8x1xi1>
    %92 = vector.shape_cast %91 : vector<8x1xi1> to vector<8x1xi1>
    %93 = vector.broadcast %92 : vector<8x1xi1> to vector<8x32xi1>
    %94 = arith.select %93, %54, %12 : vector<8x32xi1>, vector<8x32xf32>
    %95 = vector.extract_strided_slice %5 {offsets = [8, 0], sizes = [8, 128], strides = [1, 1]} : vector<64x256xf32> to vector<8x128xf32>
    %96 = vector.extract_strided_slice %5 {offsets = [48, 128], sizes = [8, 128], strides = [1, 1]} : vector<64x256xf32> to vector<8x128xf32>
    %97 = tpu.concatenate %95, %96 in 1 : vector<8x128xf32>, vector<8x128xf32> -> vector<8x256xf32>
    %98 = tpu.concatenate %61, %67 in 1 : vector<8x32xf32>, vector<8x32xf32> -> vector<8x64xf32>
    %cst_29 = arith.constant dense<0.000000e+00> : vector<8x256xf32>
    %99 = tpu.matmul %98, %6, %cst_29 {dimension_numbers = #tpu.dot_dimension_numbers<[1], [0], [0], [1], [0, 0, 1, 1], [], []>} : vector<8x64xf32>, vector<64x256xf32>, vector<8x256xf32> -> vector<8x256xf32>
    %100 = arith.addf %97, %99 : vector<8x256xf32>
    %101 = vector.extract_strided_slice %100 {offsets = [0, 0], sizes = [8, 96], strides = [1, 1]} : vector<8x256xf32> to vector<8x96xf32>
    %cst_30 = arith.constant 5.000000e-01 : f32
    %102 = vector.broadcast %cst_30 : f32 to vector<8x96xf32>
    %103 = arith.mulf %102, %101 : vector<8x96xf32>
    %104 = math.tanh %103 : vector<8x96xf32>
    %cst_31 = arith.constant 1.000000e+00 : f32
    %105 = vector.broadcast %cst_31 : f32 to vector<8x96xf32>
    %106 = arith.addf %104, %105 : vector<8x96xf32>
    %cst_32 = arith.constant 5.000000e-01 : f32
    %107 = vector.broadcast %cst_32 : f32 to vector<8x96xf32>
    %108 = arith.mulf %107, %106 : vector<8x96xf32>
    %109 = vector.extract_strided_slice %100 {offsets = [0, 96], sizes = [8, 32], strides = [1, 1]} : vector<8x256xf32> to vector<8x32xf32>
    %110 = math.tanh %109 : vector<8x32xf32>
    %111 = vector.extract_strided_slice %100 {offsets = [0, 128], sizes = [8, 96], strides = [1, 1]} : vector<8x256xf32> to vector<8x96xf32>
    %cst_33 = arith.constant 5.000000e-01 : f32
    %112 = vector.broadcast %cst_33 : f32 to vector<8x96xf32>
    %113 = arith.mulf %112, %111 : vector<8x96xf32>
    %114 = math.tanh %113 : vector<8x96xf32>
    %cst_34 = arith.constant 1.000000e+00 : f32
    %115 = vector.broadcast %cst_34 : f32 to vector<8x96xf32>
    %116 = arith.addf %114, %115 : vector<8x96xf32>
    %cst_35 = arith.constant 5.000000e-01 : f32
    %117 = vector.broadcast %cst_35 : f32 to vector<8x96xf32>
    %118 = arith.mulf %117, %116 : vector<8x96xf32>
    %119 = vector.extract_strided_slice %100 {offsets = [0, 224], sizes = [8, 32], strides = [1, 1]} : vector<8x256xf32> to vector<8x32xf32>
    %120 = math.tanh %119 : vector<8x32xf32>
    %121 = vector.extract_strided_slice %108 {offsets = [0, 32], sizes = [8, 32], strides = [1, 1]} : vector<8x96xf32> to vector<8x32xf32>
    %122 = arith.mulf %121, %64 : vector<8x32xf32>
    %123 = vector.extract_strided_slice %108 {offsets = [0, 0], sizes = [8, 32], strides = [1, 1]} : vector<8x96xf32> to vector<8x32xf32>
    %124 = arith.mulf %123, %110 : vector<8x32xf32>
    %125 = arith.addf %122, %124 : vector<8x32xf32>
    %126 = vector.extract_strided_slice %108 {offsets = [0, 64], sizes = [8, 32], strides = [1, 1]} : vector<8x96xf32> to vector<8x32xf32>
    %127 = math.tanh %125 : vector<8x32xf32>
    %128 = arith.mulf %126, %127 : vector<8x32xf32>
    %129 = vector.extract_strided_slice %118 {offsets = [0, 32], sizes = [8, 32], strides = [1, 1]} : vector<8x96xf32> to vector<8x32xf32>
    %130 = arith.mulf %129, %70 : vector<8x32xf32>
    %131 = vector.extract_strided_slice %118 {offsets = [0, 0], sizes = [8, 32], strides = [1, 1]} : vector<8x96xf32> to vector<8x32xf32>
    %132 = arith.mulf %131, %120 : vector<8x32xf32>
    %133 = arith.addf %130, %132 : vector<8x32xf32>
    %134 = vector.extract_strided_slice %118 {offsets = [0, 64], sizes = [8, 32], strides = [1, 1]} : vector<8x96xf32> to vector<8x32xf32>
    %135 = math.tanh %133 : vector<8x32xf32>
    %136 = arith.mulf %134, %135 : vector<8x32xf32>
    %c1_i32 = arith.constant 1 : i32
    %137 = vector.broadcast %c1_i32 : i32 to vector<8x1xi32>
    %138 = arith.cmpi sgt, %7, %137 : vector<8x1xi32>
    %c6_i32 = arith.constant 6 : i32
    %139 = vector.broadcast %c6_i32 : i32 to vector<8x1xi32>
    %140 = arith.cmpi sgt, %7, %139 : vector<8x1xi32>
    %141 = vector.shape_cast %138 : vector<8x1xi1> to vector<8x1xi1>
    %142 = vector.broadcast %141 : vector<8x1xi1> to vector<8x32xi1>
    %143 = arith.select %142, %128, %61 : vector<8x32xi1>, vector<8x32xf32>
    %144 = vector.shape_cast %138 : vector<8x1xi1> to vector<8x1xi1>
    %145 = vector.broadcast %144 : vector<8x1xi1> to vector<8x32xi1>
    %146 = arith.select %145, %125, %64 : vector<8x32xi1>, vector<8x32xf32>
    %147 = vector.shape_cast %140 : vector<8x1xi1> to vector<8x1xi1>
    %148 = vector.broadcast %147 : vector<8x1xi1> to vector<8x32xi1>
    %149 = arith.select %148, %136, %67 : vector<8x32xi1>, vector<8x32xf32>
    %150 = vector.shape_cast %140 : vector<8x1xi1> to vector<8x1xi1>
    %151 = vector.broadcast %150 : vector<8x1xi1> to vector<8x32xi1>
    %152 = arith.select %151, %133, %70 : vector<8x32xi1>, vector<8x32xf32>
    %c1_i32_36 = arith.constant 1 : i32
    %153 = vector.broadcast %c1_i32_36 : i32 to vector<8x1xi32>
    %154 = arith.cmpi eq, %8, %153 : vector<8x1xi32>
    %155 = arith.andi %138, %154 : vector<8x1xi1>
    %156 = vector.shape_cast %155 : vector<8x1xi1> to vector<8x1xi1>
    %157 = vector.broadcast %156 : vector<8x1xi1> to vector<8x32xi1>
    %158 = arith.select %157, %128, %76 : vector<8x32xi1>, vector<8x32xf32>
    %c1_i32_37 = arith.constant 1 : i32
    %159 = vector.broadcast %c1_i32_37 : i32 to vector<8x1xi32>
    %160 = arith.cmpi eq, %10, %159 : vector<8x1xi32>
    %161 = arith.andi %138, %160 : vector<8x1xi1>
    %162 = vector.shape_cast %161 : vector<8x1xi1> to vector<8x1xi1>
    %163 = vector.broadcast %162 : vector<8x1xi1> to vector<8x32xi1>
    %164 = arith.select %163, %128, %82 : vector<8x32xi1>, vector<8x32xf32>
    %c6_i32_38 = arith.constant 6 : i32
    %165 = vector.broadcast %c6_i32_38 : i32 to vector<8x1xi32>
    %166 = arith.cmpi eq, %9, %165 : vector<8x1xi32>
    %167 = arith.andi %140, %166 : vector<8x1xi1>
    %168 = vector.shape_cast %167 : vector<8x1xi1> to vector<8x1xi1>
    %169 = vector.broadcast %168 : vector<8x1xi1> to vector<8x32xi1>
    %170 = arith.select %169, %136, %88 : vector<8x32xi1>, vector<8x32xf32>
    %c6_i32_39 = arith.constant 6 : i32
    %171 = vector.broadcast %c6_i32_39 : i32 to vector<8x1xi32>
    %172 = arith.cmpi eq, %11, %171 : vector<8x1xi32>
    %173 = arith.andi %140, %172 : vector<8x1xi1>
    %174 = vector.shape_cast %173 : vector<8x1xi1> to vector<8x1xi1>
    %175 = vector.broadcast %174 : vector<8x1xi1> to vector<8x32xi1>
    %176 = arith.select %175, %136, %94 : vector<8x32xi1>, vector<8x32xf32>
    %177 = vector.extract_strided_slice %5 {offsets = [16, 0], sizes = [8, 128], strides = [1, 1]} : vector<64x256xf32> to vector<8x128xf32>
    %178 = vector.extract_strided_slice %5 {offsets = [40, 128], sizes = [8, 128], strides = [1, 1]} : vector<64x256xf32> to vector<8x128xf32>
    %179 = tpu.concatenate %177, %178 in 1 : vector<8x128xf32>, vector<8x128xf32> -> vector<8x256xf32>
    %180 = tpu.concatenate %143, %149 in 1 : vector<8x32xf32>, vector<8x32xf32> -> vector<8x64xf32>
    %cst_40 = arith.constant dense<0.000000e+00> : vector<8x256xf32>
    %181 = tpu.matmul %180, %6, %cst_40 {dimension_numbers = #tpu.dot_dimension_numbers<[1], [0], [0], [1], [0, 0, 1, 1], [], []>} : vector<8x64xf32>, vector<64x256xf32>, vector<8x256xf32> -> vector<8x256xf32>
    %182 = arith.addf %179, %181 : vector<8x256xf32>
    %183 = vector.extract_strided_slice %182 {offsets = [0, 0], sizes = [8, 96], strides = [1, 1]} : vector<8x256xf32> to vector<8x96xf32>
    %cst_41 = arith.constant 5.000000e-01 : f32
    %184 = vector.broadcast %cst_41 : f32 to vector<8x96xf32>
    %185 = arith.mulf %184, %183 : vector<8x96xf32>
    %186 = math.tanh %185 : vector<8x96xf32>
    %cst_42 = arith.constant 1.000000e+00 : f32
    %187 = vector.broadcast %cst_42 : f32 to vector<8x96xf32>
    %188 = arith.addf %186, %187 : vector<8x96xf32>
    %cst_43 = arith.constant 5.000000e-01 : f32
    %189 = vector.broadcast %cst_43 : f32 to vector<8x96xf32>
    %190 = arith.mulf %189, %188 : vector<8x96xf32>
    %191 = vector.extract_strided_slice %182 {offsets = [0, 96], sizes = [8, 32], strides = [1, 1]} : vector<8x256xf32> to vector<8x32xf32>
    %192 = math.tanh %191 : vector<8x32xf32>
    %193 = vector.extract_strided_slice %182 {offsets = [0, 128], sizes = [8, 96], strides = [1, 1]} : vector<8x256xf32> to vector<8x96xf32>
    %cst_44 = arith.constant 5.000000e-01 : f32
    %194 = vector.broadcast %cst_44 : f32 to vector<8x96xf32>
    %195 = arith.mulf %194, %193 : vector<8x96xf32>
    %196 = math.tanh %195 : vector<8x96xf32>
    %cst_45 = arith.constant 1.000000e+00 : f32
    %197 = vector.broadcast %cst_45 : f32 to vector<8x96xf32>
    %198 = arith.addf %196, %197 : vector<8x96xf32>
    %cst_46 = arith.constant 5.000000e-01 : f32
    %199 = vector.broadcast %cst_46 : f32 to vector<8x96xf32>
    %200 = arith.mulf %199, %198 : vector<8x96xf32>
    %201 = vector.extract_strided_slice %182 {offsets = [0, 224], sizes = [8, 32], strides = [1, 1]} : vector<8x256xf32> to vector<8x32xf32>
    %202 = math.tanh %201 : vector<8x32xf32>
    %203 = vector.extract_strided_slice %190 {offsets = [0, 32], sizes = [8, 32], strides = [1, 1]} : vector<8x96xf32> to vector<8x32xf32>
    %204 = arith.mulf %203, %146 : vector<8x32xf32>
    %205 = vector.extract_strided_slice %190 {offsets = [0, 0], sizes = [8, 32], strides = [1, 1]} : vector<8x96xf32> to vector<8x32xf32>
    %206 = arith.mulf %205, %192 : vector<8x32xf32>
    %207 = arith.addf %204, %206 : vector<8x32xf32>
    %208 = vector.extract_strided_slice %190 {offsets = [0, 64], sizes = [8, 32], strides = [1, 1]} : vector<8x96xf32> to vector<8x32xf32>
    %209 = math.tanh %207 : vector<8x32xf32>
    %210 = arith.mulf %208, %209 : vector<8x32xf32>
    %211 = vector.extract_strided_slice %200 {offsets = [0, 32], sizes = [8, 32], strides = [1, 1]} : vector<8x96xf32> to vector<8x32xf32>
    %212 = arith.mulf %211, %152 : vector<8x32xf32>
    %213 = vector.extract_strided_slice %200 {offsets = [0, 0], sizes = [8, 32], strides = [1, 1]} : vector<8x96xf32> to vector<8x32xf32>
    %214 = arith.mulf %213, %202 : vector<8x32xf32>
    %215 = arith.addf %212, %214 : vector<8x32xf32>
    %216 = vector.extract_strided_slice %200 {offsets = [0, 64], sizes = [8, 32], strides = [1, 1]} : vector<8x96xf32> to vector<8x32xf32>
    %217 = math.tanh %215 : vector<8x32xf32>
    %218 = arith.mulf %216, %217 : vector<8x32xf32>
    %c2_i32 = arith.constant 2 : i32
    %219 = vector.broadcast %c2_i32 : i32 to vector<8x1xi32>
    %220 = arith.cmpi sgt, %7, %219 : vector<8x1xi32>
    %c5_i32 = arith.constant 5 : i32
    %221 = vector.broadcast %c5_i32 : i32 to vector<8x1xi32>
    %222 = arith.cmpi sgt, %7, %221 : vector<8x1xi32>
    %223 = vector.shape_cast %220 : vector<8x1xi1> to vector<8x1xi1>
    %224 = vector.broadcast %223 : vector<8x1xi1> to vector<8x32xi1>
    %225 = arith.select %224, %210, %143 : vector<8x32xi1>, vector<8x32xf32>
    %226 = vector.shape_cast %220 : vector<8x1xi1> to vector<8x1xi1>
    %227 = vector.broadcast %226 : vector<8x1xi1> to vector<8x32xi1>
    %228 = arith.select %227, %207, %146 : vector<8x32xi1>, vector<8x32xf32>
    %229 = vector.shape_cast %222 : vector<8x1xi1> to vector<8x1xi1>
    %230 = vector.broadcast %229 : vector<8x1xi1> to vector<8x32xi1>
    %231 = arith.select %230, %218, %149 : vector<8x32xi1>, vector<8x32xf32>
    %232 = vector.shape_cast %222 : vector<8x1xi1> to vector<8x1xi1>
    %233 = vector.broadcast %232 : vector<8x1xi1> to vector<8x32xi1>
    %234 = arith.select %233, %215, %152 : vector<8x32xi1>, vector<8x32xf32>
    %c2_i32_47 = arith.constant 2 : i32
    %235 = vector.broadcast %c2_i32_47 : i32 to vector<8x1xi32>
    %236 = arith.cmpi eq, %8, %235 : vector<8x1xi32>
    %237 = arith.andi %220, %236 : vector<8x1xi1>
    %238 = vector.shape_cast %237 : vector<8x1xi1> to vector<8x1xi1>
    %239 = vector.broadcast %238 : vector<8x1xi1> to vector<8x32xi1>
    %240 = arith.select %239, %210, %158 : vector<8x32xi1>, vector<8x32xf32>
    %c2_i32_48 = arith.constant 2 : i32
    %241 = vector.broadcast %c2_i32_48 : i32 to vector<8x1xi32>
    %242 = arith.cmpi eq, %10, %241 : vector<8x1xi32>
    %243 = arith.andi %220, %242 : vector<8x1xi1>
    %244 = vector.shape_cast %243 : vector<8x1xi1> to vector<8x1xi1>
    %245 = vector.broadcast %244 : vector<8x1xi1> to vector<8x32xi1>
    %246 = arith.select %245, %210, %164 : vector<8x32xi1>, vector<8x32xf32>
    %c5_i32_49 = arith.constant 5 : i32
    %247 = vector.broadcast %c5_i32_49 : i32 to vector<8x1xi32>
    %248 = arith.cmpi eq, %9, %247 : vector<8x1xi32>
    %249 = arith.andi %222, %248 : vector<8x1xi1>
    %250 = vector.shape_cast %249 : vector<8x1xi1> to vector<8x1xi1>
    %251 = vector.broadcast %250 : vector<8x1xi1> to vector<8x32xi1>
    %252 = arith.select %251, %218, %170 : vector<8x32xi1>, vector<8x32xf32>
    %c5_i32_50 = arith.constant 5 : i32
    %253 = vector.broadcast %c5_i32_50 : i32 to vector<8x1xi32>
    %254 = arith.cmpi eq, %11, %253 : vector<8x1xi32>
    %255 = arith.andi %222, %254 : vector<8x1xi1>
    %256 = vector.shape_cast %255 : vector<8x1xi1> to vector<8x1xi1>
    %257 = vector.broadcast %256 : vector<8x1xi1> to vector<8x32xi1>
    %258 = arith.select %257, %218, %176 : vector<8x32xi1>, vector<8x32xf32>
    %259 = vector.extract_strided_slice %5 {offsets = [24, 0], sizes = [8, 128], strides = [1, 1]} : vector<64x256xf32> to vector<8x128xf32>
    %260 = vector.extract_strided_slice %5 {offsets = [32, 128], sizes = [8, 128], strides = [1, 1]} : vector<64x256xf32> to vector<8x128xf32>
    %261 = tpu.concatenate %259, %260 in 1 : vector<8x128xf32>, vector<8x128xf32> -> vector<8x256xf32>
    %262 = tpu.concatenate %225, %231 in 1 : vector<8x32xf32>, vector<8x32xf32> -> vector<8x64xf32>
    %cst_51 = arith.constant dense<0.000000e+00> : vector<8x256xf32>
    %263 = tpu.matmul %262, %6, %cst_51 {dimension_numbers = #tpu.dot_dimension_numbers<[1], [0], [0], [1], [0, 0, 1, 1], [], []>} : vector<8x64xf32>, vector<64x256xf32>, vector<8x256xf32> -> vector<8x256xf32>
    %264 = arith.addf %261, %263 : vector<8x256xf32>
    %265 = vector.extract_strided_slice %264 {offsets = [0, 0], sizes = [8, 96], strides = [1, 1]} : vector<8x256xf32> to vector<8x96xf32>
    %cst_52 = arith.constant 5.000000e-01 : f32
    %266 = vector.broadcast %cst_52 : f32 to vector<8x96xf32>
    %267 = arith.mulf %266, %265 : vector<8x96xf32>
    %268 = math.tanh %267 : vector<8x96xf32>
    %cst_53 = arith.constant 1.000000e+00 : f32
    %269 = vector.broadcast %cst_53 : f32 to vector<8x96xf32>
    %270 = arith.addf %268, %269 : vector<8x96xf32>
    %cst_54 = arith.constant 5.000000e-01 : f32
    %271 = vector.broadcast %cst_54 : f32 to vector<8x96xf32>
    %272 = arith.mulf %271, %270 : vector<8x96xf32>
    %273 = vector.extract_strided_slice %264 {offsets = [0, 96], sizes = [8, 32], strides = [1, 1]} : vector<8x256xf32> to vector<8x32xf32>
    %274 = math.tanh %273 : vector<8x32xf32>
    %275 = vector.extract_strided_slice %264 {offsets = [0, 128], sizes = [8, 96], strides = [1, 1]} : vector<8x256xf32> to vector<8x96xf32>
    %cst_55 = arith.constant 5.000000e-01 : f32
    %276 = vector.broadcast %cst_55 : f32 to vector<8x96xf32>
    %277 = arith.mulf %276, %275 : vector<8x96xf32>
    %278 = math.tanh %277 : vector<8x96xf32>
    %cst_56 = arith.constant 1.000000e+00 : f32
    %279 = vector.broadcast %cst_56 : f32 to vector<8x96xf32>
    %280 = arith.addf %278, %279 : vector<8x96xf32>
    %cst_57 = arith.constant 5.000000e-01 : f32
    %281 = vector.broadcast %cst_57 : f32 to vector<8x96xf32>
    %282 = arith.mulf %281, %280 : vector<8x96xf32>
    %283 = vector.extract_strided_slice %264 {offsets = [0, 224], sizes = [8, 32], strides = [1, 1]} : vector<8x256xf32> to vector<8x32xf32>
    %284 = math.tanh %283 : vector<8x32xf32>
    %285 = vector.extract_strided_slice %272 {offsets = [0, 32], sizes = [8, 32], strides = [1, 1]} : vector<8x96xf32> to vector<8x32xf32>
    %286 = arith.mulf %285, %228 : vector<8x32xf32>
    %287 = vector.extract_strided_slice %272 {offsets = [0, 0], sizes = [8, 32], strides = [1, 1]} : vector<8x96xf32> to vector<8x32xf32>
    %288 = arith.mulf %287, %274 : vector<8x32xf32>
    %289 = arith.addf %286, %288 : vector<8x32xf32>
    %290 = vector.extract_strided_slice %272 {offsets = [0, 64], sizes = [8, 32], strides = [1, 1]} : vector<8x96xf32> to vector<8x32xf32>
    %291 = math.tanh %289 : vector<8x32xf32>
    %292 = arith.mulf %290, %291 : vector<8x32xf32>
    %293 = vector.extract_strided_slice %282 {offsets = [0, 32], sizes = [8, 32], strides = [1, 1]} : vector<8x96xf32> to vector<8x32xf32>
    %294 = arith.mulf %293, %234 : vector<8x32xf32>
    %295 = vector.extract_strided_slice %282 {offsets = [0, 0], sizes = [8, 32], strides = [1, 1]} : vector<8x96xf32> to vector<8x32xf32>
    %296 = arith.mulf %295, %284 : vector<8x32xf32>
    %297 = arith.addf %294, %296 : vector<8x32xf32>
    %298 = vector.extract_strided_slice %282 {offsets = [0, 64], sizes = [8, 32], strides = [1, 1]} : vector<8x96xf32> to vector<8x32xf32>
    %299 = math.tanh %297 : vector<8x32xf32>
    %300 = arith.mulf %298, %299 : vector<8x32xf32>
    %c3_i32 = arith.constant 3 : i32
    %301 = vector.broadcast %c3_i32 : i32 to vector<8x1xi32>
    %302 = arith.cmpi sgt, %7, %301 : vector<8x1xi32>
    %c4_i32 = arith.constant 4 : i32
    %303 = vector.broadcast %c4_i32 : i32 to vector<8x1xi32>
    %304 = arith.cmpi sgt, %7, %303 : vector<8x1xi32>
    %305 = vector.shape_cast %302 : vector<8x1xi1> to vector<8x1xi1>
    %306 = vector.broadcast %305 : vector<8x1xi1> to vector<8x32xi1>
    %307 = arith.select %306, %292, %225 : vector<8x32xi1>, vector<8x32xf32>
    %308 = vector.shape_cast %302 : vector<8x1xi1> to vector<8x1xi1>
    %309 = vector.broadcast %308 : vector<8x1xi1> to vector<8x32xi1>
    %310 = arith.select %309, %289, %228 : vector<8x32xi1>, vector<8x32xf32>
    %311 = vector.shape_cast %304 : vector<8x1xi1> to vector<8x1xi1>
    %312 = vector.broadcast %311 : vector<8x1xi1> to vector<8x32xi1>
    %313 = arith.select %312, %300, %231 : vector<8x32xi1>, vector<8x32xf32>
    %314 = vector.shape_cast %304 : vector<8x1xi1> to vector<8x1xi1>
    %315 = vector.broadcast %314 : vector<8x1xi1> to vector<8x32xi1>
    %316 = arith.select %315, %297, %234 : vector<8x32xi1>, vector<8x32xf32>
    %c3_i32_58 = arith.constant 3 : i32
    %317 = vector.broadcast %c3_i32_58 : i32 to vector<8x1xi32>
    %318 = arith.cmpi eq, %8, %317 : vector<8x1xi32>
    %319 = arith.andi %302, %318 : vector<8x1xi1>
    %320 = vector.shape_cast %319 : vector<8x1xi1> to vector<8x1xi1>
    %321 = vector.broadcast %320 : vector<8x1xi1> to vector<8x32xi1>
    %322 = arith.select %321, %292, %240 : vector<8x32xi1>, vector<8x32xf32>
    %c3_i32_59 = arith.constant 3 : i32
    %323 = vector.broadcast %c3_i32_59 : i32 to vector<8x1xi32>
    %324 = arith.cmpi eq, %10, %323 : vector<8x1xi32>
    %325 = arith.andi %302, %324 : vector<8x1xi1>
    %326 = vector.shape_cast %325 : vector<8x1xi1> to vector<8x1xi1>
    %327 = vector.broadcast %326 : vector<8x1xi1> to vector<8x32xi1>
    %328 = arith.select %327, %292, %246 : vector<8x32xi1>, vector<8x32xf32>
    %c4_i32_60 = arith.constant 4 : i32
    %329 = vector.broadcast %c4_i32_60 : i32 to vector<8x1xi32>
    %330 = arith.cmpi eq, %9, %329 : vector<8x1xi32>
    %331 = arith.andi %304, %330 : vector<8x1xi1>
    %332 = vector.shape_cast %331 : vector<8x1xi1> to vector<8x1xi1>
    %333 = vector.broadcast %332 : vector<8x1xi1> to vector<8x32xi1>
    %334 = arith.select %333, %300, %252 : vector<8x32xi1>, vector<8x32xf32>
    %c4_i32_61 = arith.constant 4 : i32
    %335 = vector.broadcast %c4_i32_61 : i32 to vector<8x1xi32>
    %336 = arith.cmpi eq, %11, %335 : vector<8x1xi32>
    %337 = arith.andi %304, %336 : vector<8x1xi1>
    %338 = vector.shape_cast %337 : vector<8x1xi1> to vector<8x1xi1>
    %339 = vector.broadcast %338 : vector<8x1xi1> to vector<8x32xi1>
    %340 = arith.select %339, %300, %258 : vector<8x32xi1>, vector<8x32xf32>
    %341 = vector.extract_strided_slice %5 {offsets = [32, 0], sizes = [8, 128], strides = [1, 1]} : vector<64x256xf32> to vector<8x128xf32>
    %342 = vector.extract_strided_slice %5 {offsets = [24, 128], sizes = [8, 128], strides = [1, 1]} : vector<64x256xf32> to vector<8x128xf32>
    %343 = tpu.concatenate %341, %342 in 1 : vector<8x128xf32>, vector<8x128xf32> -> vector<8x256xf32>
    %344 = tpu.concatenate %307, %313 in 1 : vector<8x32xf32>, vector<8x32xf32> -> vector<8x64xf32>
    %cst_62 = arith.constant dense<0.000000e+00> : vector<8x256xf32>
    %345 = tpu.matmul %344, %6, %cst_62 {dimension_numbers = #tpu.dot_dimension_numbers<[1], [0], [0], [1], [0, 0, 1, 1], [], []>} : vector<8x64xf32>, vector<64x256xf32>, vector<8x256xf32> -> vector<8x256xf32>
    %346 = arith.addf %343, %345 : vector<8x256xf32>
    %347 = vector.extract_strided_slice %346 {offsets = [0, 0], sizes = [8, 96], strides = [1, 1]} : vector<8x256xf32> to vector<8x96xf32>
    %cst_63 = arith.constant 5.000000e-01 : f32
    %348 = vector.broadcast %cst_63 : f32 to vector<8x96xf32>
    %349 = arith.mulf %348, %347 : vector<8x96xf32>
    %350 = math.tanh %349 : vector<8x96xf32>
    %cst_64 = arith.constant 1.000000e+00 : f32
    %351 = vector.broadcast %cst_64 : f32 to vector<8x96xf32>
    %352 = arith.addf %350, %351 : vector<8x96xf32>
    %cst_65 = arith.constant 5.000000e-01 : f32
    %353 = vector.broadcast %cst_65 : f32 to vector<8x96xf32>
    %354 = arith.mulf %353, %352 : vector<8x96xf32>
    %355 = vector.extract_strided_slice %346 {offsets = [0, 96], sizes = [8, 32], strides = [1, 1]} : vector<8x256xf32> to vector<8x32xf32>
    %356 = math.tanh %355 : vector<8x32xf32>
    %357 = vector.extract_strided_slice %346 {offsets = [0, 128], sizes = [8, 96], strides = [1, 1]} : vector<8x256xf32> to vector<8x96xf32>
    %cst_66 = arith.constant 5.000000e-01 : f32
    %358 = vector.broadcast %cst_66 : f32 to vector<8x96xf32>
    %359 = arith.mulf %358, %357 : vector<8x96xf32>
    %360 = math.tanh %359 : vector<8x96xf32>
    %cst_67 = arith.constant 1.000000e+00 : f32
    %361 = vector.broadcast %cst_67 : f32 to vector<8x96xf32>
    %362 = arith.addf %360, %361 : vector<8x96xf32>
    %cst_68 = arith.constant 5.000000e-01 : f32
    %363 = vector.broadcast %cst_68 : f32 to vector<8x96xf32>
    %364 = arith.mulf %363, %362 : vector<8x96xf32>
    %365 = vector.extract_strided_slice %346 {offsets = [0, 224], sizes = [8, 32], strides = [1, 1]} : vector<8x256xf32> to vector<8x32xf32>
    %366 = math.tanh %365 : vector<8x32xf32>
    %367 = vector.extract_strided_slice %354 {offsets = [0, 32], sizes = [8, 32], strides = [1, 1]} : vector<8x96xf32> to vector<8x32xf32>
    %368 = arith.mulf %367, %310 : vector<8x32xf32>
    %369 = vector.extract_strided_slice %354 {offsets = [0, 0], sizes = [8, 32], strides = [1, 1]} : vector<8x96xf32> to vector<8x32xf32>
    %370 = arith.mulf %369, %356 : vector<8x32xf32>
    %371 = arith.addf %368, %370 : vector<8x32xf32>
    %372 = vector.extract_strided_slice %354 {offsets = [0, 64], sizes = [8, 32], strides = [1, 1]} : vector<8x96xf32> to vector<8x32xf32>
    %373 = math.tanh %371 : vector<8x32xf32>
    %374 = arith.mulf %372, %373 : vector<8x32xf32>
    %375 = vector.extract_strided_slice %364 {offsets = [0, 32], sizes = [8, 32], strides = [1, 1]} : vector<8x96xf32> to vector<8x32xf32>
    %376 = arith.mulf %375, %316 : vector<8x32xf32>
    %377 = vector.extract_strided_slice %364 {offsets = [0, 0], sizes = [8, 32], strides = [1, 1]} : vector<8x96xf32> to vector<8x32xf32>
    %378 = arith.mulf %377, %366 : vector<8x32xf32>
    %379 = arith.addf %376, %378 : vector<8x32xf32>
    %380 = vector.extract_strided_slice %364 {offsets = [0, 64], sizes = [8, 32], strides = [1, 1]} : vector<8x96xf32> to vector<8x32xf32>
    %381 = math.tanh %379 : vector<8x32xf32>
    %382 = arith.mulf %380, %381 : vector<8x32xf32>
    %c4_i32_69 = arith.constant 4 : i32
    %383 = vector.broadcast %c4_i32_69 : i32 to vector<8x1xi32>
    %384 = arith.cmpi sgt, %7, %383 : vector<8x1xi32>
    %c3_i32_70 = arith.constant 3 : i32
    %385 = vector.broadcast %c3_i32_70 : i32 to vector<8x1xi32>
    %386 = arith.cmpi sgt, %7, %385 : vector<8x1xi32>
    %387 = vector.shape_cast %384 : vector<8x1xi1> to vector<8x1xi1>
    %388 = vector.broadcast %387 : vector<8x1xi1> to vector<8x32xi1>
    %389 = arith.select %388, %374, %307 : vector<8x32xi1>, vector<8x32xf32>
    %390 = vector.shape_cast %384 : vector<8x1xi1> to vector<8x1xi1>
    %391 = vector.broadcast %390 : vector<8x1xi1> to vector<8x32xi1>
    %392 = arith.select %391, %371, %310 : vector<8x32xi1>, vector<8x32xf32>
    %393 = vector.shape_cast %386 : vector<8x1xi1> to vector<8x1xi1>
    %394 = vector.broadcast %393 : vector<8x1xi1> to vector<8x32xi1>
    %395 = arith.select %394, %382, %313 : vector<8x32xi1>, vector<8x32xf32>
    %396 = vector.shape_cast %386 : vector<8x1xi1> to vector<8x1xi1>
    %397 = vector.broadcast %396 : vector<8x1xi1> to vector<8x32xi1>
    %398 = arith.select %397, %379, %316 : vector<8x32xi1>, vector<8x32xf32>
    %c4_i32_71 = arith.constant 4 : i32
    %399 = vector.broadcast %c4_i32_71 : i32 to vector<8x1xi32>
    %400 = arith.cmpi eq, %8, %399 : vector<8x1xi32>
    %401 = arith.andi %384, %400 : vector<8x1xi1>
    %402 = vector.shape_cast %401 : vector<8x1xi1> to vector<8x1xi1>
    %403 = vector.broadcast %402 : vector<8x1xi1> to vector<8x32xi1>
    %404 = arith.select %403, %374, %322 : vector<8x32xi1>, vector<8x32xf32>
    %c4_i32_72 = arith.constant 4 : i32
    %405 = vector.broadcast %c4_i32_72 : i32 to vector<8x1xi32>
    %406 = arith.cmpi eq, %10, %405 : vector<8x1xi32>
    %407 = arith.andi %384, %406 : vector<8x1xi1>
    %408 = vector.shape_cast %407 : vector<8x1xi1> to vector<8x1xi1>
    %409 = vector.broadcast %408 : vector<8x1xi1> to vector<8x32xi1>
    %410 = arith.select %409, %374, %328 : vector<8x32xi1>, vector<8x32xf32>
    %c3_i32_73 = arith.constant 3 : i32
    %411 = vector.broadcast %c3_i32_73 : i32 to vector<8x1xi32>
    %412 = arith.cmpi eq, %9, %411 : vector<8x1xi32>
    %413 = arith.andi %386, %412 : vector<8x1xi1>
    %414 = vector.shape_cast %413 : vector<8x1xi1> to vector<8x1xi1>
    %415 = vector.broadcast %414 : vector<8x1xi1> to vector<8x32xi1>
    %416 = arith.select %415, %382, %334 : vector<8x32xi1>, vector<8x32xf32>
    %c3_i32_74 = arith.constant 3 : i32
    %417 = vector.broadcast %c3_i32_74 : i32 to vector<8x1xi32>
    %418 = arith.cmpi eq, %11, %417 : vector<8x1xi32>
    %419 = arith.andi %386, %418 : vector<8x1xi1>
    %420 = vector.shape_cast %419 : vector<8x1xi1> to vector<8x1xi1>
    %421 = vector.broadcast %420 : vector<8x1xi1> to vector<8x32xi1>
    %422 = arith.select %421, %382, %340 : vector<8x32xi1>, vector<8x32xf32>
    %423 = vector.extract_strided_slice %5 {offsets = [40, 0], sizes = [8, 128], strides = [1, 1]} : vector<64x256xf32> to vector<8x128xf32>
    %424 = vector.extract_strided_slice %5 {offsets = [16, 128], sizes = [8, 128], strides = [1, 1]} : vector<64x256xf32> to vector<8x128xf32>
    %425 = tpu.concatenate %423, %424 in 1 : vector<8x128xf32>, vector<8x128xf32> -> vector<8x256xf32>
    %426 = tpu.concatenate %389, %395 in 1 : vector<8x32xf32>, vector<8x32xf32> -> vector<8x64xf32>
    %cst_75 = arith.constant dense<0.000000e+00> : vector<8x256xf32>
    %427 = tpu.matmul %426, %6, %cst_75 {dimension_numbers = #tpu.dot_dimension_numbers<[1], [0], [0], [1], [0, 0, 1, 1], [], []>} : vector<8x64xf32>, vector<64x256xf32>, vector<8x256xf32> -> vector<8x256xf32>
    %428 = arith.addf %425, %427 : vector<8x256xf32>
    %429 = vector.extract_strided_slice %428 {offsets = [0, 0], sizes = [8, 96], strides = [1, 1]} : vector<8x256xf32> to vector<8x96xf32>
    %cst_76 = arith.constant 5.000000e-01 : f32
    %430 = vector.broadcast %cst_76 : f32 to vector<8x96xf32>
    %431 = arith.mulf %430, %429 : vector<8x96xf32>
    %432 = math.tanh %431 : vector<8x96xf32>
    %cst_77 = arith.constant 1.000000e+00 : f32
    %433 = vector.broadcast %cst_77 : f32 to vector<8x96xf32>
    %434 = arith.addf %432, %433 : vector<8x96xf32>
    %cst_78 = arith.constant 5.000000e-01 : f32
    %435 = vector.broadcast %cst_78 : f32 to vector<8x96xf32>
    %436 = arith.mulf %435, %434 : vector<8x96xf32>
    %437 = vector.extract_strided_slice %428 {offsets = [0, 96], sizes = [8, 32], strides = [1, 1]} : vector<8x256xf32> to vector<8x32xf32>
    %438 = math.tanh %437 : vector<8x32xf32>
    %439 = vector.extract_strided_slice %428 {offsets = [0, 128], sizes = [8, 96], strides = [1, 1]} : vector<8x256xf32> to vector<8x96xf32>
    %cst_79 = arith.constant 5.000000e-01 : f32
    %440 = vector.broadcast %cst_79 : f32 to vector<8x96xf32>
    %441 = arith.mulf %440, %439 : vector<8x96xf32>
    %442 = math.tanh %441 : vector<8x96xf32>
    %cst_80 = arith.constant 1.000000e+00 : f32
    %443 = vector.broadcast %cst_80 : f32 to vector<8x96xf32>
    %444 = arith.addf %442, %443 : vector<8x96xf32>
    %cst_81 = arith.constant 5.000000e-01 : f32
    %445 = vector.broadcast %cst_81 : f32 to vector<8x96xf32>
    %446 = arith.mulf %445, %444 : vector<8x96xf32>
    %447 = vector.extract_strided_slice %428 {offsets = [0, 224], sizes = [8, 32], strides = [1, 1]} : vector<8x256xf32> to vector<8x32xf32>
    %448 = math.tanh %447 : vector<8x32xf32>
    %449 = vector.extract_strided_slice %436 {offsets = [0, 32], sizes = [8, 32], strides = [1, 1]} : vector<8x96xf32> to vector<8x32xf32>
    %450 = arith.mulf %449, %392 : vector<8x32xf32>
    %451 = vector.extract_strided_slice %436 {offsets = [0, 0], sizes = [8, 32], strides = [1, 1]} : vector<8x96xf32> to vector<8x32xf32>
    %452 = arith.mulf %451, %438 : vector<8x32xf32>
    %453 = arith.addf %450, %452 : vector<8x32xf32>
    %454 = vector.extract_strided_slice %436 {offsets = [0, 64], sizes = [8, 32], strides = [1, 1]} : vector<8x96xf32> to vector<8x32xf32>
    %455 = math.tanh %453 : vector<8x32xf32>
    %456 = arith.mulf %454, %455 : vector<8x32xf32>
    %457 = vector.extract_strided_slice %446 {offsets = [0, 32], sizes = [8, 32], strides = [1, 1]} : vector<8x96xf32> to vector<8x32xf32>
    %458 = arith.mulf %457, %398 : vector<8x32xf32>
    %459 = vector.extract_strided_slice %446 {offsets = [0, 0], sizes = [8, 32], strides = [1, 1]} : vector<8x96xf32> to vector<8x32xf32>
    %460 = arith.mulf %459, %448 : vector<8x32xf32>
    %461 = arith.addf %458, %460 : vector<8x32xf32>
    %462 = vector.extract_strided_slice %446 {offsets = [0, 64], sizes = [8, 32], strides = [1, 1]} : vector<8x96xf32> to vector<8x32xf32>
    %463 = math.tanh %461 : vector<8x32xf32>
    %464 = arith.mulf %462, %463 : vector<8x32xf32>
    %c5_i32_82 = arith.constant 5 : i32
    %465 = vector.broadcast %c5_i32_82 : i32 to vector<8x1xi32>
    %466 = arith.cmpi sgt, %7, %465 : vector<8x1xi32>
    %c2_i32_83 = arith.constant 2 : i32
    %467 = vector.broadcast %c2_i32_83 : i32 to vector<8x1xi32>
    %468 = arith.cmpi sgt, %7, %467 : vector<8x1xi32>
    %469 = vector.shape_cast %466 : vector<8x1xi1> to vector<8x1xi1>
    %470 = vector.broadcast %469 : vector<8x1xi1> to vector<8x32xi1>
    %471 = arith.select %470, %456, %389 : vector<8x32xi1>, vector<8x32xf32>
    %472 = vector.shape_cast %466 : vector<8x1xi1> to vector<8x1xi1>
    %473 = vector.broadcast %472 : vector<8x1xi1> to vector<8x32xi1>
    %474 = arith.select %473, %453, %392 : vector<8x32xi1>, vector<8x32xf32>
    %475 = vector.shape_cast %468 : vector<8x1xi1> to vector<8x1xi1>
    %476 = vector.broadcast %475 : vector<8x1xi1> to vector<8x32xi1>
    %477 = arith.select %476, %464, %395 : vector<8x32xi1>, vector<8x32xf32>
    %478 = vector.shape_cast %468 : vector<8x1xi1> to vector<8x1xi1>
    %479 = vector.broadcast %478 : vector<8x1xi1> to vector<8x32xi1>
    %480 = arith.select %479, %461, %398 : vector<8x32xi1>, vector<8x32xf32>
    %c5_i32_84 = arith.constant 5 : i32
    %481 = vector.broadcast %c5_i32_84 : i32 to vector<8x1xi32>
    %482 = arith.cmpi eq, %8, %481 : vector<8x1xi32>
    %483 = arith.andi %466, %482 : vector<8x1xi1>
    %484 = vector.shape_cast %483 : vector<8x1xi1> to vector<8x1xi1>
    %485 = vector.broadcast %484 : vector<8x1xi1> to vector<8x32xi1>
    %486 = arith.select %485, %456, %404 : vector<8x32xi1>, vector<8x32xf32>
    %c5_i32_85 = arith.constant 5 : i32
    %487 = vector.broadcast %c5_i32_85 : i32 to vector<8x1xi32>
    %488 = arith.cmpi eq, %10, %487 : vector<8x1xi32>
    %489 = arith.andi %466, %488 : vector<8x1xi1>
    %490 = vector.shape_cast %489 : vector<8x1xi1> to vector<8x1xi1>
    %491 = vector.broadcast %490 : vector<8x1xi1> to vector<8x32xi1>
    %492 = arith.select %491, %456, %410 : vector<8x32xi1>, vector<8x32xf32>
    %c2_i32_86 = arith.constant 2 : i32
    %493 = vector.broadcast %c2_i32_86 : i32 to vector<8x1xi32>
    %494 = arith.cmpi eq, %9, %493 : vector<8x1xi32>
    %495 = arith.andi %468, %494 : vector<8x1xi1>
    %496 = vector.shape_cast %495 : vector<8x1xi1> to vector<8x1xi1>
    %497 = vector.broadcast %496 : vector<8x1xi1> to vector<8x32xi1>
    %498 = arith.select %497, %464, %416 : vector<8x32xi1>, vector<8x32xf32>
    %c2_i32_87 = arith.constant 2 : i32
    %499 = vector.broadcast %c2_i32_87 : i32 to vector<8x1xi32>
    %500 = arith.cmpi eq, %11, %499 : vector<8x1xi32>
    %501 = arith.andi %468, %500 : vector<8x1xi1>
    %502 = vector.shape_cast %501 : vector<8x1xi1> to vector<8x1xi1>
    %503 = vector.broadcast %502 : vector<8x1xi1> to vector<8x32xi1>
    %504 = arith.select %503, %464, %422 : vector<8x32xi1>, vector<8x32xf32>
    %505 = vector.extract_strided_slice %5 {offsets = [48, 0], sizes = [8, 128], strides = [1, 1]} : vector<64x256xf32> to vector<8x128xf32>
    %506 = vector.extract_strided_slice %5 {offsets = [8, 128], sizes = [8, 128], strides = [1, 1]} : vector<64x256xf32> to vector<8x128xf32>
    %507 = tpu.concatenate %505, %506 in 1 : vector<8x128xf32>, vector<8x128xf32> -> vector<8x256xf32>
    %508 = tpu.concatenate %471, %477 in 1 : vector<8x32xf32>, vector<8x32xf32> -> vector<8x64xf32>
    %cst_88 = arith.constant dense<0.000000e+00> : vector<8x256xf32>
    %509 = tpu.matmul %508, %6, %cst_88 {dimension_numbers = #tpu.dot_dimension_numbers<[1], [0], [0], [1], [0, 0, 1, 1], [], []>} : vector<8x64xf32>, vector<64x256xf32>, vector<8x256xf32> -> vector<8x256xf32>
    %510 = arith.addf %507, %509 : vector<8x256xf32>
    %511 = vector.extract_strided_slice %510 {offsets = [0, 0], sizes = [8, 96], strides = [1, 1]} : vector<8x256xf32> to vector<8x96xf32>
    %cst_89 = arith.constant 5.000000e-01 : f32
    %512 = vector.broadcast %cst_89 : f32 to vector<8x96xf32>
    %513 = arith.mulf %512, %511 : vector<8x96xf32>
    %514 = math.tanh %513 : vector<8x96xf32>
    %cst_90 = arith.constant 1.000000e+00 : f32
    %515 = vector.broadcast %cst_90 : f32 to vector<8x96xf32>
    %516 = arith.addf %514, %515 : vector<8x96xf32>
    %cst_91 = arith.constant 5.000000e-01 : f32
    %517 = vector.broadcast %cst_91 : f32 to vector<8x96xf32>
    %518 = arith.mulf %517, %516 : vector<8x96xf32>
    %519 = vector.extract_strided_slice %510 {offsets = [0, 96], sizes = [8, 32], strides = [1, 1]} : vector<8x256xf32> to vector<8x32xf32>
    %520 = math.tanh %519 : vector<8x32xf32>
    %521 = vector.extract_strided_slice %510 {offsets = [0, 128], sizes = [8, 96], strides = [1, 1]} : vector<8x256xf32> to vector<8x96xf32>
    %cst_92 = arith.constant 5.000000e-01 : f32
    %522 = vector.broadcast %cst_92 : f32 to vector<8x96xf32>
    %523 = arith.mulf %522, %521 : vector<8x96xf32>
    %524 = math.tanh %523 : vector<8x96xf32>
    %cst_93 = arith.constant 1.000000e+00 : f32
    %525 = vector.broadcast %cst_93 : f32 to vector<8x96xf32>
    %526 = arith.addf %524, %525 : vector<8x96xf32>
    %cst_94 = arith.constant 5.000000e-01 : f32
    %527 = vector.broadcast %cst_94 : f32 to vector<8x96xf32>
    %528 = arith.mulf %527, %526 : vector<8x96xf32>
    %529 = vector.extract_strided_slice %510 {offsets = [0, 224], sizes = [8, 32], strides = [1, 1]} : vector<8x256xf32> to vector<8x32xf32>
    %530 = math.tanh %529 : vector<8x32xf32>
    %531 = vector.extract_strided_slice %518 {offsets = [0, 32], sizes = [8, 32], strides = [1, 1]} : vector<8x96xf32> to vector<8x32xf32>
    %532 = arith.mulf %531, %474 : vector<8x32xf32>
    %533 = vector.extract_strided_slice %518 {offsets = [0, 0], sizes = [8, 32], strides = [1, 1]} : vector<8x96xf32> to vector<8x32xf32>
    %534 = arith.mulf %533, %520 : vector<8x32xf32>
    %535 = arith.addf %532, %534 : vector<8x32xf32>
    %536 = vector.extract_strided_slice %518 {offsets = [0, 64], sizes = [8, 32], strides = [1, 1]} : vector<8x96xf32> to vector<8x32xf32>
    %537 = math.tanh %535 : vector<8x32xf32>
    %538 = arith.mulf %536, %537 : vector<8x32xf32>
    %539 = vector.extract_strided_slice %528 {offsets = [0, 32], sizes = [8, 32], strides = [1, 1]} : vector<8x96xf32> to vector<8x32xf32>
    %540 = arith.mulf %539, %480 : vector<8x32xf32>
    %541 = vector.extract_strided_slice %528 {offsets = [0, 0], sizes = [8, 32], strides = [1, 1]} : vector<8x96xf32> to vector<8x32xf32>
    %542 = arith.mulf %541, %530 : vector<8x32xf32>
    %543 = arith.addf %540, %542 : vector<8x32xf32>
    %544 = vector.extract_strided_slice %528 {offsets = [0, 64], sizes = [8, 32], strides = [1, 1]} : vector<8x96xf32> to vector<8x32xf32>
    %545 = math.tanh %543 : vector<8x32xf32>
    %546 = arith.mulf %544, %545 : vector<8x32xf32>
    %c6_i32_95 = arith.constant 6 : i32
    %547 = vector.broadcast %c6_i32_95 : i32 to vector<8x1xi32>
    %548 = arith.cmpi sgt, %7, %547 : vector<8x1xi32>
    %c1_i32_96 = arith.constant 1 : i32
    %549 = vector.broadcast %c1_i32_96 : i32 to vector<8x1xi32>
    %550 = arith.cmpi sgt, %7, %549 : vector<8x1xi32>
    %551 = vector.shape_cast %548 : vector<8x1xi1> to vector<8x1xi1>
    %552 = vector.broadcast %551 : vector<8x1xi1> to vector<8x32xi1>
    %553 = arith.select %552, %538, %471 : vector<8x32xi1>, vector<8x32xf32>
    %554 = vector.shape_cast %548 : vector<8x1xi1> to vector<8x1xi1>
    %555 = vector.broadcast %554 : vector<8x1xi1> to vector<8x32xi1>
    %556 = arith.select %555, %535, %474 : vector<8x32xi1>, vector<8x32xf32>
    %557 = vector.shape_cast %550 : vector<8x1xi1> to vector<8x1xi1>
    %558 = vector.broadcast %557 : vector<8x1xi1> to vector<8x32xi1>
    %559 = arith.select %558, %546, %477 : vector<8x32xi1>, vector<8x32xf32>
    %560 = vector.shape_cast %550 : vector<8x1xi1> to vector<8x1xi1>
    %561 = vector.broadcast %560 : vector<8x1xi1> to vector<8x32xi1>
    %562 = arith.select %561, %543, %480 : vector<8x32xi1>, vector<8x32xf32>
    %c6_i32_97 = arith.constant 6 : i32
    %563 = vector.broadcast %c6_i32_97 : i32 to vector<8x1xi32>
    %564 = arith.cmpi eq, %8, %563 : vector<8x1xi32>
    %565 = arith.andi %548, %564 : vector<8x1xi1>
    %566 = vector.shape_cast %565 : vector<8x1xi1> to vector<8x1xi1>
    %567 = vector.broadcast %566 : vector<8x1xi1> to vector<8x32xi1>
    %568 = arith.select %567, %538, %486 : vector<8x32xi1>, vector<8x32xf32>
    %c6_i32_98 = arith.constant 6 : i32
    %569 = vector.broadcast %c6_i32_98 : i32 to vector<8x1xi32>
    %570 = arith.cmpi eq, %10, %569 : vector<8x1xi32>
    %571 = arith.andi %548, %570 : vector<8x1xi1>
    %572 = vector.shape_cast %571 : vector<8x1xi1> to vector<8x1xi1>
    %573 = vector.broadcast %572 : vector<8x1xi1> to vector<8x32xi1>
    %574 = arith.select %573, %538, %492 : vector<8x32xi1>, vector<8x32xf32>
    %c1_i32_99 = arith.constant 1 : i32
    %575 = vector.broadcast %c1_i32_99 : i32 to vector<8x1xi32>
    %576 = arith.cmpi eq, %9, %575 : vector<8x1xi32>
    %577 = arith.andi %550, %576 : vector<8x1xi1>
    %578 = vector.shape_cast %577 : vector<8x1xi1> to vector<8x1xi1>
    %579 = vector.broadcast %578 : vector<8x1xi1> to vector<8x32xi1>
    %580 = arith.select %579, %546, %498 : vector<8x32xi1>, vector<8x32xf32>
    %c1_i32_100 = arith.constant 1 : i32
    %581 = vector.broadcast %c1_i32_100 : i32 to vector<8x1xi32>
    %582 = arith.cmpi eq, %11, %581 : vector<8x1xi32>
    %583 = arith.andi %550, %582 : vector<8x1xi1>
    %584 = vector.shape_cast %583 : vector<8x1xi1> to vector<8x1xi1>
    %585 = vector.broadcast %584 : vector<8x1xi1> to vector<8x32xi1>
    %586 = arith.select %585, %546, %504 : vector<8x32xi1>, vector<8x32xf32>
    %587 = vector.extract_strided_slice %5 {offsets = [56, 0], sizes = [8, 128], strides = [1, 1]} : vector<64x256xf32> to vector<8x128xf32>
    %588 = vector.extract_strided_slice %5 {offsets = [0, 128], sizes = [8, 128], strides = [1, 1]} : vector<64x256xf32> to vector<8x128xf32>
    %589 = tpu.concatenate %587, %588 in 1 : vector<8x128xf32>, vector<8x128xf32> -> vector<8x256xf32>
    %590 = tpu.concatenate %553, %559 in 1 : vector<8x32xf32>, vector<8x32xf32> -> vector<8x64xf32>
    %cst_101 = arith.constant dense<0.000000e+00> : vector<8x256xf32>
    %591 = tpu.matmul %590, %6, %cst_101 {dimension_numbers = #tpu.dot_dimension_numbers<[1], [0], [0], [1], [0, 0, 1, 1], [], []>} : vector<8x64xf32>, vector<64x256xf32>, vector<8x256xf32> -> vector<8x256xf32>
    %592 = arith.addf %589, %591 : vector<8x256xf32>
    %593 = vector.extract_strided_slice %592 {offsets = [0, 0], sizes = [8, 96], strides = [1, 1]} : vector<8x256xf32> to vector<8x96xf32>
    %cst_102 = arith.constant 5.000000e-01 : f32
    %594 = vector.broadcast %cst_102 : f32 to vector<8x96xf32>
    %595 = arith.mulf %594, %593 : vector<8x96xf32>
    %596 = math.tanh %595 : vector<8x96xf32>
    %cst_103 = arith.constant 1.000000e+00 : f32
    %597 = vector.broadcast %cst_103 : f32 to vector<8x96xf32>
    %598 = arith.addf %596, %597 : vector<8x96xf32>
    %cst_104 = arith.constant 5.000000e-01 : f32
    %599 = vector.broadcast %cst_104 : f32 to vector<8x96xf32>
    %600 = arith.mulf %599, %598 : vector<8x96xf32>
    %601 = vector.extract_strided_slice %592 {offsets = [0, 96], sizes = [8, 32], strides = [1, 1]} : vector<8x256xf32> to vector<8x32xf32>
    %602 = math.tanh %601 : vector<8x32xf32>
    %603 = vector.extract_strided_slice %592 {offsets = [0, 128], sizes = [8, 96], strides = [1, 1]} : vector<8x256xf32> to vector<8x96xf32>
    %cst_105 = arith.constant 5.000000e-01 : f32
    %604 = vector.broadcast %cst_105 : f32 to vector<8x96xf32>
    %605 = arith.mulf %604, %603 : vector<8x96xf32>
    %606 = math.tanh %605 : vector<8x96xf32>
    %cst_106 = arith.constant 1.000000e+00 : f32
    %607 = vector.broadcast %cst_106 : f32 to vector<8x96xf32>
    %608 = arith.addf %606, %607 : vector<8x96xf32>
    %cst_107 = arith.constant 5.000000e-01 : f32
    %609 = vector.broadcast %cst_107 : f32 to vector<8x96xf32>
    %610 = arith.mulf %609, %608 : vector<8x96xf32>
    %611 = vector.extract_strided_slice %592 {offsets = [0, 224], sizes = [8, 32], strides = [1, 1]} : vector<8x256xf32> to vector<8x32xf32>
    %612 = math.tanh %611 : vector<8x32xf32>
    %613 = vector.extract_strided_slice %600 {offsets = [0, 32], sizes = [8, 32], strides = [1, 1]} : vector<8x96xf32> to vector<8x32xf32>
    %614 = arith.mulf %613, %556 : vector<8x32xf32>
    %615 = vector.extract_strided_slice %600 {offsets = [0, 0], sizes = [8, 32], strides = [1, 1]} : vector<8x96xf32> to vector<8x32xf32>
    %616 = arith.mulf %615, %602 : vector<8x32xf32>
    %617 = arith.addf %614, %616 : vector<8x32xf32>
    %618 = vector.extract_strided_slice %600 {offsets = [0, 64], sizes = [8, 32], strides = [1, 1]} : vector<8x96xf32> to vector<8x32xf32>
    %619 = math.tanh %617 : vector<8x32xf32>
    %620 = arith.mulf %618, %619 : vector<8x32xf32>
    %621 = vector.extract_strided_slice %610 {offsets = [0, 32], sizes = [8, 32], strides = [1, 1]} : vector<8x96xf32> to vector<8x32xf32>
    %622 = arith.mulf %621, %562 : vector<8x32xf32>
    %623 = vector.extract_strided_slice %610 {offsets = [0, 0], sizes = [8, 32], strides = [1, 1]} : vector<8x96xf32> to vector<8x32xf32>
    %624 = arith.mulf %623, %612 : vector<8x32xf32>
    %625 = arith.addf %622, %624 : vector<8x32xf32>
    %626 = vector.extract_strided_slice %610 {offsets = [0, 64], sizes = [8, 32], strides = [1, 1]} : vector<8x96xf32> to vector<8x32xf32>
    %627 = math.tanh %625 : vector<8x32xf32>
    %628 = arith.mulf %626, %627 : vector<8x32xf32>
    %c7_i32_108 = arith.constant 7 : i32
    %629 = vector.broadcast %c7_i32_108 : i32 to vector<8x1xi32>
    %630 = arith.cmpi sgt, %7, %629 : vector<8x1xi32>
    %c0_i32_109 = arith.constant 0 : i32
    %631 = vector.broadcast %c0_i32_109 : i32 to vector<8x1xi32>
    %632 = arith.cmpi sgt, %7, %631 : vector<8x1xi32>
    %c7_i32_110 = arith.constant 7 : i32
    %633 = vector.broadcast %c7_i32_110 : i32 to vector<8x1xi32>
    %634 = arith.cmpi eq, %8, %633 : vector<8x1xi32>
    %635 = arith.andi %630, %634 : vector<8x1xi1>
    %636 = vector.shape_cast %635 : vector<8x1xi1> to vector<8x1xi1>
    %637 = vector.broadcast %636 : vector<8x1xi1> to vector<8x32xi1>
    %638 = arith.select %637, %620, %568 : vector<8x32xi1>, vector<8x32xf32>
    %c7_i32_111 = arith.constant 7 : i32
    %639 = vector.broadcast %c7_i32_111 : i32 to vector<8x1xi32>
    %640 = arith.cmpi eq, %10, %639 : vector<8x1xi32>
    %641 = arith.andi %630, %640 : vector<8x1xi1>
    %642 = vector.shape_cast %641 : vector<8x1xi1> to vector<8x1xi1>
    %643 = vector.broadcast %642 : vector<8x1xi1> to vector<8x32xi1>
    %644 = arith.select %643, %620, %574 : vector<8x32xi1>, vector<8x32xf32>
    %c0_i32_112 = arith.constant 0 : i32
    %645 = vector.broadcast %c0_i32_112 : i32 to vector<8x1xi32>
    %646 = arith.cmpi eq, %9, %645 : vector<8x1xi32>
    %647 = arith.andi %632, %646 : vector<8x1xi1>
    %648 = vector.shape_cast %647 : vector<8x1xi1> to vector<8x1xi1>
    %649 = vector.broadcast %648 : vector<8x1xi1> to vector<8x32xi1>
    %650 = arith.select %649, %628, %580 : vector<8x32xi1>, vector<8x32xf32>
    %c0_i32_113 = arith.constant 0 : i32
    %651 = vector.broadcast %c0_i32_113 : i32 to vector<8x1xi32>
    %652 = arith.cmpi eq, %11, %651 : vector<8x1xi32>
    %653 = arith.andi %632, %652 : vector<8x1xi1>
    %654 = vector.shape_cast %653 : vector<8x1xi1> to vector<8x1xi1>
    %655 = vector.broadcast %654 : vector<8x1xi1> to vector<8x32xi1>
    %656 = arith.select %655, %628, %586 : vector<8x32xi1>, vector<8x32xf32>
    %657 = tpu.concatenate %650, %638, %656, %644 in 1 : vector<8x32xf32>, vector<8x32xf32>, vector<8x32xf32>, vector<8x32xf32> -> vector<8x128xf32>
    %c0_114 = arith.constant 0 : index
    %c0_115 = arith.constant 0 : index
    %658 = vector.load %arg9[%c0_114, %c0_115] : memref<128x32xf32, #tpu.memory_space<vmem>>, vector<128x32xf32>
    %cst_116 = arith.constant dense<0.000000e+00> : vector<8x32xf32>
    %659 = tpu.matmul %657, %658, %cst_116 {dimension_numbers = #tpu.dot_dimension_numbers<[1], [0], [0], [1], [0, 0, 1, 1], [], []>} : vector<8x128xf32>, vector<128x32xf32>, vector<8x32xf32> -> vector<8x32xf32>
    %c0_117 = arith.constant 0 : index
    %c0_118 = arith.constant 0 : index
    %660 = vector.load %arg10[%c0_117, %c0_118] : memref<1x32xf32, #tpu.memory_space<vmem>>, vector<1x32xf32>
    %661 = vector.broadcast %660 : vector<1x32xf32> to vector<8x32xf32>
    %662 = arith.addf %659, %661 : vector<8x32xf32>
    %663 = math.tanh %662 : vector<8x32xf32>
    %c0_119 = arith.constant 0 : index
    %c0_120 = arith.constant 0 : index
    %664 = vector.load %arg11[%c0_119, %c0_120] : memref<32x4xf32, #tpu.memory_space<vmem>>, vector<32x4xf32>
    %cst_121 = arith.constant dense<0.000000e+00> : vector<8x4xf32>
    %665 = tpu.matmul %663, %664, %cst_121 {dimension_numbers = #tpu.dot_dimension_numbers<[1], [0], [0], [1], [0, 0, 1, 1], [], []>} : vector<8x32xf32>, vector<32x4xf32>, vector<8x4xf32> -> vector<8x4xf32>
    %c0_122 = arith.constant 0 : index
    %c0_123 = arith.constant 0 : index
    %666 = vector.load %arg12[%c0_122, %c0_123] : memref<1x4xf32, #tpu.memory_space<vmem>>, vector<1x4xf32>
    %667 = vector.broadcast %666 : vector<1x4xf32> to vector<8x4xf32>
    %668 = arith.addf %665, %667 : vector<8x4xf32>
    %c0_124 = arith.constant 0 : index
    %c0_125 = arith.constant 0 : index
    %669 = vector.load %arg13[%c0_124, %c0_125] : memref<8x4xf32, #tpu.memory_space<vmem>>, vector<8x4xf32>
    tpu.vector_store %arg13[%c0_124, %c0_125], %668 {strides = array<i32>} : memref<8x4xf32, #tpu.memory_space<vmem>>, vector<8x4xf32>,
    %cst_126 = arith.constant dense<0xFF800000> : vector<8xf32>
    %670 = vector.multi_reduction <maximumf>, %668, %cst_126 [1] : vector<8x4xf32> to vector<8xf32>
    %671 = vector.shape_cast %670 : vector<8xf32> to vector<8x1xf32>
    %672 = vector.broadcast %671 : vector<8x1xf32> to vector<8x4xf32>
    %673 = arith.subf %668, %672 : vector<8x4xf32>
    %674 = math.exp %673 : vector<8x4xf32>
    %cst_127 = arith.constant dense<0.000000e+00> : vector<8xf32>
    %675 = vector.multi_reduction <add>, %674, %cst_127 [1] : vector<8x4xf32> to vector<8xf32>
    %676 = vector.shape_cast %675 : vector<8xf32> to vector<8x1xf32>
    %677 = tpu.reciprocal %676 {approx = true} : vector<8x1xf32> -> vector<8x1xf32>
    %678 = arith.mulf %676, %677 : vector<8x1xf32>
    %cst_128 = arith.constant 2.000000e+00 : f32
    %679 = vector.broadcast %cst_128 : f32 to vector<8x1xf32>
    %680 = arith.subf %679, %678 : vector<8x1xf32>
    %681 = arith.mulf %677, %680 : vector<8x1xf32>
    %682 = vector.broadcast %681 : vector<8x1xf32> to vector<8x4xf32>
    %683 = arith.mulf %674, %682 : vector<8x4xf32>
    %c0_129 = arith.constant 0 : index
    %c0_130 = arith.constant 0 : index
    %684 = vector.load %arg14[%c0_129, %c0_130] : memref<8x4xf32, #tpu.memory_space<vmem>>, vector<8x4xf32>
    tpu.vector_store %arg14[%c0_129, %c0_130], %683 {strides = array<i32>} : memref<8x4xf32, #tpu.memory_space<vmem>>, vector<8x4xf32>,
    return
  }
}

</mosaic_0001>

<llo_original>
// kernel: bilstm_forward.1
$region0: #{bilstm_forward.1}
  #allocation0 [shape = 'u32[]', space=smem, size = 0x4, offset = 0x4, fixed_abs, tag = 'smem constant byte address 0x4 - core index']
  #allocation1 [shape = 'u32[144,128]{1,0:T(1,128)}', space=vmem, size = 0x12000, scoped, tag = 'internal scratch']
  %s0 = inlined_call_operand.vmem [shape: s32[8,1], index: 0, kind: input, shape index: {}]
  %s1 = inlined_call_operand.vmem [shape: s32[8,1], index: 1, kind: input, shape index: {}]
  %s2 = inlined_call_operand.vmem [shape: s32[8,1], index: 2, kind: input, shape index: {}]
  %s3 = inlined_call_operand.vmem [shape: s32[8,1], index: 3, kind: input, shape index: {}]
  %s4 = inlined_call_operand.vmem [shape: s32[8,1], index: 4, kind: input, shape index: {}]
  %s5 = inlined_call_operand.vmem [shape: f32[64,72], index: 5, kind: input, shape index: {}]
  %s6 = inlined_call_operand.vmem [shape: f32[72,256], index: 6, kind: input, shape index: {}]
  %s7 = inlined_call_operand.vmem [shape: f32[1,256], index: 7, kind: input, shape index: {}]
  %s8 = inlined_call_operand.vmem [shape: f32[64,256], index: 8, kind: input, shape index: {}]
  %s9 = inlined_call_operand.vmem [shape: f32[128,32], index: 9, kind: input, shape index: {}]
  %s10 = inlined_call_operand.vmem [shape: f32[1,32], index: 10, kind: input, shape index: {}]
  %s11 = inlined_call_operand.vmem [shape: f32[32,4], index: 11, kind: input, shape index: {}]
  %s12 = inlined_call_operand.vmem [shape: f32[1,4], index: 12, kind: input, shape index: {}]
  %s13 = inlined_call_operand.vmem [shape: f32[8,4], index: 13, kind: output, shape index: {0}]
  %s14 = inlined_call_operand.vmem [shape: f32[8,4], index: 14, kind: output, shape index: {1}]
  %15 = xla_tuple %s13, %s14
  %s16 = sld [smem:[#allocation0]]
  $region70: #{bilstm_forward.1} parent=0
    _
  %s18 = ssub.s32 1, %s16
  %s19 = scalar_select 0, %s18, %s16
  // Predicated region
  $region2: #{bilstm_forward.1} parent=0 // pred_check
    _
  $region3: #{bilstm_forward.1} parent=0 // pred_check_branch
    %21 = sbr.rel (0) target = $region5
  $region4: #{bilstm_forward.1} parent=0 // pred_region
    _
  $region5: #{bilstm_forward.1} parent=0 // pred_fallthru
    _
  // Predicated region
  $region6: #{bilstm_forward.1} parent=0 // pred_check
    _
  $region7: #{bilstm_forward.1} parent=0 // pred_check_branch
    %23 = sbr.rel (0) target = $region9
  $region8: #{bilstm_forward.1} parent=0 // pred_region
    _
  $region9: #{bilstm_forward.1} parent=0 // pred_fallthru
    _
  // Predicated region
  $region10: #{bilstm_forward.1} parent=0 // pred_check
    _
  $region11: #{bilstm_forward.1} parent=0 // pred_check_branch
    %25 = sbr.rel (0) target = $region13
  $region12: #{bilstm_forward.1} parent=0 // pred_region
    _
  $region13: #{bilstm_forward.1} parent=0 // pred_fallthru
    _
  // Predicated region
  $region14: #{bilstm_forward.1} parent=0 // pred_check
    _
  $region15: #{bilstm_forward.1} parent=0 // pred_check_branch
    %27 = sbr.rel (0) target = $region17
  $region16: #{bilstm_forward.1} parent=0 // pred_region
    _
  $region17: #{bilstm_forward.1} parent=0 // pred_fallthru
    _
  // Predicated region
  $region18: #{bilstm_forward.1} parent=0 // pred_check
    _
  $region19: #{bilstm_forward.1} parent=0 // pred_check_branch
    %29 = sbr.rel (0) target = $region21
  $region20: #{bilstm_forward.1} parent=0 // pred_region
    _
  $region21: #{bilstm_forward.1} parent=0 // pred_fallthru
    _
  // Predicated region
  $region22: #{bilstm_forward.1} parent=0 // pred_check
    _
  $region23: #{bilstm_forward.1} parent=0 // pred_check_branch
    %31 = sbr.rel (0) target = $region25
  $region24: #{bilstm_forward.1} parent=0 // pred_region
    _
  $region25: #{bilstm_forward.1} parent=0 // pred_fallthru
    _
  // Predicated region
  $region26: #{bilstm_forward.1} parent=0 // pred_check
    _
  $region27: #{bilstm_forward.1} parent=0 // pred_check_branch
    %33 = sbr.rel (0) target = $region29
  $region28: #{bilstm_forward.1} parent=0 // pred_region
    _
  $region29: #{bilstm_forward.1} parent=0 // pred_fallthru
    _
  // Predicated region
  $region30: #{bilstm_forward.1} parent=0 // pred_check
    _
  $region31: #{bilstm_forward.1} parent=0 // pred_check_branch
    %35 = sbr.rel (0) target = $region33
  $region32: #{bilstm_forward.1} parent=0 // pred_region
    _
  $region33: #{bilstm_forward.1} parent=0 // pred_fallthru
    _
  // Predicated region
  $region34: #{bilstm_forward.1} parent=0 // pred_check
    _
  $region35: #{bilstm_forward.1} parent=0 // pred_check_branch
    %37 = sbr.rel (0) target = $region37
  $region36: #{bilstm_forward.1} parent=0 // pred_region
    _
  $region37: #{bilstm_forward.1} parent=0 // pred_fallthru
    _
  // Predicated region
  $region38: #{bilstm_forward.1} parent=0 // pred_check
    _
  $region39: #{bilstm_forward.1} parent=0 // pred_check_branch
    %39 = sbr.rel (0) target = $region41
  $region40: #{bilstm_forward.1} parent=0 // pred_region
    _
  $region41: #{bilstm_forward.1} parent=0 // pred_fallthru
    _
  // Predicated region
  $region42: #{bilstm_forward.1} parent=0 // pred_check
    _
  $region43: #{bilstm_forward.1} parent=0 // pred_check_branch
    %41 = sbr.rel (0) target = $region45
  $region44: #{bilstm_forward.1} parent=0 // pred_region
    _
  $region45: #{bilstm_forward.1} parent=0 // pred_fallthru
    _
  // Predicated region
  $region46: #{bilstm_forward.1} parent=0 // pred_check
    _
  $region47: #{bilstm_forward.1} parent=0 // pred_check_branch
    %43 = sbr.rel (0) target = $region49
  $region48: #{bilstm_forward.1} parent=0 // pred_region
    _
  $region49: #{bilstm_forward.1} parent=0 // pred_fallthru
    _
  // Predicated region
  $region50: #{bilstm_forward.1} parent=0 // pred_check
    _
  $region51: #{bilstm_forward.1} parent=0 // pred_check_branch
    %45 = sbr.rel (0) target = $region53
  $region52: #{bilstm_forward.1} parent=0 // pred_region
    _
  $region53: #{bilstm_forward.1} parent=0 // pred_fallthru
    _
  %v46 = vld [vmem:[%s5] sm:$0xff]
  %v47 = vld [vmem:[%s5 + $0x8] sm:$0xff]
  %v48 = vld [vmem:[%s5 + $0x10] sm:$0xff]
  %v49 = vld [vmem:[%s5 + $0x18] sm:$0xff]
  %v50 = vld [vmem:[%s5 + $0x20] sm:$0xff]
  %v51 = vld [vmem:[%s5 + $0x28] sm:$0xff]
  %v52 = vld [vmem:[%s5 + $0x30] sm:$0xff]
  %v53 = vld [vmem:[%s5 + $0x38] sm:$0xff]
  %v54 = vld [vmem:[%s6] sm:$0xff]
  %v55 = vld [vmem:[%s6 + $0x8] sm:$0xff]
  %v56 = vld [vmem:[%s6 + $0x10] sm:$0xff]
  %v57 = vld [vmem:[%s6 + $0x18] sm:$0xff]
  %v58 = vld [vmem:[%s6 + $0x20] sm:$0xff]
  %v59 = vld [vmem:[%s6 + $0x28] sm:$0xff]
  %v60 = vld [vmem:[%s6 + $0x30] sm:$0xff]
  %v61 = vld [vmem:[%s6 + $0x38] sm:$0xff]
  %v62 = vld [vmem:[%s6 + $0x40] sm:$0xff]
  %v63 = vld [vmem:[%s6 + $0x48] sm:$0xff]
  %v64 = vld [vmem:[%s6 + $0x50] sm:$0xff]
  %v65 = vld [vmem:[%s6 + $0x58] sm:$0xff]
  %v66 = vld [vmem:[%s6 + $0x60] sm:$0xff]
  %v67 = vld [vmem:[%s6 + $0x68] sm:$0xff]
  %v68 = vld [vmem:[%s6 + $0x70] sm:$0xff]
  %v69 = vld [vmem:[%s6 + $0x78] sm:$0xff]
  %v70 = vld [vmem:[%s6 + $0x80] sm:$0xff]
  %v71 = vld [vmem:[%s6 + $0x88] sm:$0xff]
  %v72 = vld [vmem:[%s7] sm:$0x3]
  %v74 = vlaneseq
  %v75 = vshrl.u32 %v74, 7
  %v76 = vsub.s32 0, %v75
  %v77 = vrot.slane %v72, %v76
  %v78 = vlaneseq
  %v79 = vshrl.u32 %v78, 7
  %v80 = vsub.s32 1, %v79
  %v81 = vrot.slane %v72, %v80
  %vm84 = vcmask 588800
  %v86 = vsel %vm84, %v46, 0
  %v89 = vsel %vm84, %v47, 0
  %v92 = vsel %vm84, %v48, 0
  %v95 = vsel %vm84, %v49, 0
  %v98 = vsel %vm84, %v50, 0
  %v101 = vsel %vm84, %v51, 0
  %v104 = vsel %vm84, %v52, 0
  %v107 = vsel %vm84, %v53, 0
  %109 = vmatprep.subr.mxu0 0.0
  %110 = vmatpush1.msra.mxu0 0.0
  %111 = vmatprep.subr.mxu0 0.0
  %112 = vmatpush1.msra.mxu0 0.0
  %113 = vmatprep.subr.mxu0 0.0
  %114 = vmatpush1.msra.mxu0 0.0
  %115 = vmatprep.subr.mxu0 0.0
  %116 = vmatpush1.msra.mxu0 0.0
  %117 = vmatprep.subr.mxu0 0.0
  %118 = vmatpush1.msra.mxu0 0.0
  %119 = vmatprep.subr.mxu0 0.0
  %120 = vmatpush1.msra.mxu0 0.0
  %121 = vmatprep.subr.mxu0 0.0
  %122 = vmatpush1.msra.mxu0 0.0
  %123 = vmatprep.subr.mxu0 %v71
  %124 = vmatpush1.msra.mxu0 %v70
  %125 = vmatprep.subr.mxu0 %v69
  %126 = vmatpush1.msra.mxu0 %v68
  %127 = vmatprep.subr.mxu0 %v67
  %128 = vmatpush1.msra.mxu0 %v66
  %129 = vmatprep.subr.mxu0 %v65
  %130 = vmatpush1.msra.mxu0 %v64
  %131 = vmatprep.subr.mxu0 %v63
  %132 = vmatpush1.msra.mxu0 %v62
  %133 = vmatprep.subr.mxu0 %v61
  %134 = vmatpush1.msra.mxu0 %v60
  %135 = vmatprep.subr.mxu0 %v59
  %136 = vmatpush1.msra.mxu0 %v58
  %137 = vmatprep.subr.mxu0 %v57
  %138 = vmatpush1.msra.mxu0 %v56
  %139 = vmatprep.subr.mxu0 %v55
  %140 = vmatpush1.msra.mxu0 %v54
  %141 = vmatprep.subr.mxu0 0.0
  %142 = vmatpush2.msra.mxu0 0.0
  %143 = vmatprep.subr.mxu0 0.0
  %144 = vmatpush2.msra.mxu0 0.0
  %145 = vmatprep.subr.mxu0 0.0
  %146 = vmatpush2.msra.mxu0 0.0
  %147 = vmatprep.subr.mxu0 0.0
  %148 = vmatpush2.msra.mxu0 0.0
  %149 = vmatprep.subr.mxu0 0.0
  %150 = vmatpush2.msra.mxu0 0.0
  %151 = vmatprep.subr.mxu0 0.0
  %152 = vmatpush2.msra.mxu0 0.0
  %153 = vmatprep.subr.mxu0 0.0
  %154 = vmatpush2.msra.mxu0 0.0
  %155 = vmatprep.subr.mxu0 0.0
  %156 = vmatpush2.msra.mxu0 0.0
  %157 = vmatprep.subr.mxu0 0.0
  %158 = vmatpush2.msra.mxu0 0.0
  %159 = vmatprep.subr.mxu0 0.0
  %160 = vmatpush2.msra.mxu0 0.0
  %161 = vmatprep.subr.mxu0 0.0
  %162 = vmatpush2.msra.mxu0 0.0
  %163 = vmatprep.subr.mxu0 0.0
  %164 = vmatpush2.msra.mxu0 0.0
  %165 = vmatprep.subr.mxu0 0.0
  %166 = vmatpush2.msra.mxu0 0.0
  %167 = vmatprep.subr.mxu0 0.0
  %168 = vmatpush2.msra.mxu0 0.0
  %169 = vmatprep.subr.mxu0 0.0
  %170 = vmatpush2.msra.mxu0 0.0
  %171 = vmatprep.subr.mxu0 0.0
  %172 = vmatpush2.msra.mxu0 0.0
  %173 = vmatprep.mubr.f32.mxu0 0.0
  %174 = vmatmul.mubr.f32.gmra.mxu0 %v86
  %v175 = vpop.f32.mrf.mxu0
  %v176 = vadd.f32 %v77, %v175
  %v177 = vpop.f32.mrf.mxu0
  %v178 = vadd.f32 %v81, %v177
  %179 = vmatprep.mubr.f32.mxu0 0.0
  %180 = vmatmul.mubr.f32.gmra.mxu0 %v89
  %v181 = vpop.f32.mrf.mxu0
  %v182 = vadd.f32 %v77, %v181
  %v183 = vpop.f32.mrf.mxu0
  %v184 = vadd.f32 %v81, %v183
  %185 = vmatprep.mubr.f32.mxu0 0.0
  %186 = vmatmul.mubr.f32.gmra.mxu0 %v92
  %v187 = vpop.f32.mrf.mxu0
  %v188 = vadd.f32 %v77, %v187
  %v189 = vpop.f32.mrf.mxu0
  %v190 = vadd.f32 %v81, %v189
  %191 = vmatprep.mubr.f32.mxu0 0.0
  %192 = vmatmul.mubr.f32.gmra.mxu0 %v95
  %v193 = vpop.f32.mrf.mxu0
  %v194 = vadd.f32 %v77, %v193
  %v195 = vpop.f32.mrf.mxu0
  %v196 = vadd.f32 %v81, %v195
  %197 = vmatprep.mubr.f32.mxu0 0.0
  %198 = vmatmul.mubr.f32.gmra.mxu0 %v98
  %v199 = vpop.f32.mrf.mxu0
  %v200 = vadd.f32 %v77, %v199
  %v201 = vpop.f32.mrf.mxu0
  %v202 = vadd.f32 %v81, %v201
  %203 = vmatprep.mubr.f32.mxu0 0.0
  %204 = vmatmul.mubr.f32.gmra.mxu0 %v101
  %v205 = vpop.f32.mrf.mxu0
  %v206 = vadd.f32 %v77, %v205
  %v207 = vpop.f32.mrf.mxu0
  %v208 = vadd.f32 %v81, %v207
  %209 = vmatprep.mubr.f32.mxu0 0.0
  %210 = vmatmul.mubr.f32.gmra.mxu0 %v104
  %v211 = vpop.f32.mrf.mxu0
  %v212 = vadd.f32 %v77, %v211
  %v213 = vpop.f32.mrf.mxu0
  %v214 = vadd.f32 %v81, %v213
  %215 = vmatprep.mubr.f32.mxu0 0.0
  %216 = vmatmul.mubr.f32.gmra.mxu0 %v107
  %v217 = vpop.f32.mrf.mxu0
  %v218 = vadd.f32 %v77, %v217
  %v219 = vpop.f32.mrf.mxu0
  %v220 = vadd.f32 %v81, %v219
  %221 = vdwg.mxu0
  %v222 = vld [vmem:[%s8] sm:$0xff]
  %v223 = vld [vmem:[%s8 + $0x8] sm:$0xff]
  %v224 = vld [vmem:[%s8 + $0x10] sm:$0xff]
  %v225 = vld [vmem:[%s8 + $0x18] sm:$0xff]
  %v226 = vld [vmem:[%s8 + $0x20] sm:$0xff]
  %v227 = vld [vmem:[%s8 + $0x28] sm:$0xff]
  %v228 = vld [vmem:[%s8 + $0x30] sm:$0xff]
  %v229 = vld [vmem:[%s8 + $0x38] sm:$0xff]
  %v230 = vld [vmem:[%s8 + $0x40] sm:$0xff]
  %v231 = vld [vmem:[%s8 + $0x48] sm:$0xff]
  %v232 = vld [vmem:[%s8 + $0x50] sm:$0xff]
  %v233 = vld [vmem:[%s8 + $0x58] sm:$0xff]
  %v234 = vld [vmem:[%s8 + $0x60] sm:$0xff]
  %v235 = vld [vmem:[%s8 + $0x68] sm:$0xff]
  %v236 = vld [vmem:[%s8 + $0x70] sm:$0xff]
  %v237 = vld [vmem:[%s8 + $0x78] sm:$0xff]
  %v238 = vld [vmem:[%s0] sm:$0xff]
  %v239 = vld [vmem:[%s1] sm:$0xff]
  %v240 = vld [vmem:[%s2] sm:$0xff]
  %v241 = vld [vmem:[%s3] sm:$0xff]
  %v242 = vld [vmem:[%s4] sm:$0xff]
  %vm243 = vcmask 523264
  %v245 = vsel %vm243, 0.0, 0
  %247 = vmatprep.subr.mxu0 0.0
  %248 = vmatpush1.msra.mxu0 0.0
  %249 = vmatprep.subr.mxu0 0.0
  %250 = vmatpush1.msra.mxu0 0.0
  %251 = vmatprep.subr.mxu0 0.0
  %252 = vmatpush1.msra.mxu0 0.0
  %253 = vmatprep.subr.mxu0 0.0
  %254 = vmatpush1.msra.mxu0 0.0
  %255 = vmatprep.subr.mxu0 0.0
  %256 = vmatpush1.msra.mxu0 0.0
  %257 = vmatprep.subr.mxu0 0.0
  %258 = vmatpush1.msra.mxu0 0.0
  %259 = vmatprep.subr.mxu0 0.0
  %260 = vmatpush1.msra.mxu0 0.0
  %261 = vmatprep.subr.mxu0 0.0
  %262 = vmatpush1.msra.mxu0 0.0
  %263 = vmatprep.subr.mxu0 %v237
  %264 = vmatpush1.msra.mxu0 %v236
  %265 = vmatprep.subr.mxu0 %v235
  %266 = vmatpush1.msra.mxu0 %v234
  %267 = vmatprep.subr.mxu0 %v233
  %268 = vmatpush1.msra.mxu0 %v232
  %269 = vmatprep.subr.mxu0 %v231
  %270 = vmatpush1.msra.mxu0 %v230
  %271 = vmatprep.subr.mxu0 %v229
  %272 = vmatpush1.msra.mxu0 %v228
  %273 = vmatprep.subr.mxu0 %v227
  %274 = vmatpush1.msra.mxu0 %v226
  %275 = vmatprep.subr.mxu0 %v225
  %276 = vmatpush1.msra.mxu0 %v224
  %277 = vmatprep.subr.mxu0 %v223
  %278 = vmatpush1.msra.mxu0 %v222
  %279 = vmatprep.subr.mxu0 0.0
  %280 = vmatpush2.msra.mxu0 0.0
  %281 = vmatprep.subr.mxu0 0.0
  %282 = vmatpush2.msra.mxu0 0.0
  %283 = vmatprep.subr.mxu0 0.0
  %284 = vmatpush2.msra.mxu0 0.0
  %285 = vmatprep.subr.mxu0 0.0
  %286 = vmatpush2.msra.mxu0 0.0
  %287 = vmatprep.subr.mxu0 0.0
  %288 = vmatpush2.msra.mxu0 0.0
  %289 = vmatprep.subr.mxu0 0.0
  %290 = vmatpush2.msra.mxu0 0.0
  %291 = vmatprep.subr.mxu0 0.0
  %292 = vmatpush2.msra.mxu0 0.0
  %293 = vmatprep.subr.mxu0 0.0
  %294 = vmatpush2.msra.mxu0 0.0
  %295 = vmatprep.subr.mxu0 0.0
  %296 = vmatpush2.msra.mxu0 0.0
  %297 = vmatprep.subr.mxu0 0.0
  %298 = vmatpush2.msra.mxu0 0.0
  %299 = vmatprep.subr.mxu0 0.0
  %300 = vmatpush2.msra.mxu0 0.0
  %301 = vmatprep.subr.mxu0 0.0
  %302 = vmatpush2.msra.mxu0 0.0
  %303 = vmatprep.subr.mxu0 0.0
  %304 = vmatpush2.msra.mxu0 0.0
  %305 = vmatprep.subr.mxu0 0.0
  %306 = vmatpush2.msra.mxu0 0.0
  %307 = vmatprep.subr.mxu0 0.0
  %308 = vmatpush2.msra.mxu0 0.0
  %309 = vmatprep.subr.mxu0 0.0
  %310 = vmatpush2.msra.mxu0 0.0
  %311 = vmatprep.mubr.f32.mxu0 0.0
  %312 = vmatmul.mubr.f32.gmra.mxu0 %v245
  %v313 = vpop.f32.mrf.mxu0
  %v314 = vadd.f32 0.0, %v313
  %v315 = vpop.f32.mrf.mxu0
  %v316 = vadd.f32 0.0, %v315
  %317 = vdwg.mxu0
  %v318 = vadd.f32 %v176, %v314
  %v319 = vadd.f32 %v220, %v316
  %v320 = vmul.f32 %v318, 0.5
  %v321 = vtanh.pop %v320
  %v322 = vadd.f32 %v321, 1.0
  %v323 = vmul.f32 %v322, 0.5
  %v324 = vtanh.pop %v318
  %v325 = vmul.f32 %v319, 0.5
  %v326 = vtanh.pop %v325
  %v327 = vadd.f32 %v326, 1.0
  %v328 = vmul.f32 %v327, 0.5
  %v329 = vtanh.pop %v319
  %v330 = vmul.f32 %v323, 0.0
  %332 = vrot.lane.b32.xlu0 %v324, 32
  %v333 = vpop.permute.xlu0 %332
  %v335 = vmul.f32 %v323, %v333
  %337 = vrot.lane.b32.xlu0 %v335, 32
  %v338 = vpop.permute.xlu0 %337
  %v340 = vadd.f32 %v330, %v338
  %v341 = vtanh.pop %v340
  %343 = vrot.lane.b32.xlu0 %v341, 32
  %v344 = vpop.permute.xlu0 %343
  %v346 = vmul.f32 %v323, %v344
  %v347 = vmul.f32 %v328, 0.0
  %349 = vrot.lane.b32.xlu0 %v329, 32
  %v350 = vpop.permute.xlu0 %349
  %v352 = vmul.f32 %v328, %v350
  %354 = vrot.lane.b32.xlu0 %v352, 32
  %v355 = vpop.permute.xlu0 %354
  %v357 = vadd.f32 %v347, %v355
  %v358 = vtanh.pop %v357
  %360 = vrot.lane.b32.xlu0 %v358, 32
  %v361 = vpop.permute.xlu0 %360
  %v363 = vmul.f32 %v328, %v361
  %vm364 = vcmp.gt.s32.totalorder %v238, 0
  %vm365 = vcmp.gt.s32.totalorder %v238, 7
  %v366 = vsel %vm364, 1, 0
  %367 = vset.pattern.permute.xlu0 0
  %368 = vperm.xlu0 %367, %v366
  %v369 = vpop.permute.xlu0 %368
  %vm370 = vcmp.eq.s32.totalorder %v369, 1
  %v371 = vsel %vm370, %v346, 0.0
  %v372 = vsel %vm370, %v340, 0.0
  %v373 = vsel %vm365, 1, 0
  %374 = vset.pattern.permute.xlu0 0
  %375 = vperm.xlu0 %374, %v373
  %v376 = vpop.permute.xlu0 %375
  %vm377 = vcmp.eq.s32.totalorder %v376, 1
  %v378 = vsel %vm377, %v363, 0.0
  %v379 = vsel %vm377, %v357, 0.0
  %vm380 = vcmp.eq.s32.totalorder %v239, 0
  %vm381 = vmand %vm364, %vm380
  %v382 = vsel %vm381, 1, 0
  %383 = vset.pattern.permute.xlu0 0
  %384 = vperm.xlu0 %383, %v382
  %v385 = vpop.permute.xlu0 %384
  %vm386 = vcmp.eq.s32.totalorder %v385, 1
  %v387 = vsel %vm386, %v346, 0.0
  %vm388 = vcmp.eq.s32.totalorder %v241, 0
  %vm389 = vmand %vm364, %vm388
  %v390 = vsel %vm389, 1, 0
  %391 = vset.pattern.permute.xlu0 0
  %392 = vperm.xlu0 %391, %v390
  %v393 = vpop.permute.xlu0 %392
  %vm394 = vcmp.eq.s32.totalorder %v393, 1
  %v395 = vsel %vm394, %v346, 0.0
  %vm396 = vcmp.eq.s32.totalorder %v240, 7
  %vm397 = vmand %vm365, %vm396
  %v398 = vsel %vm397, 1, 0
  %399 = vset.pattern.permute.xlu0 0
  %400 = vperm.xlu0 %399, %v398
  %v401 = vpop.permute.xlu0 %400
  %vm402 = vcmp.eq.s32.totalorder %v401, 1
  %v403 = vsel %vm402, %v363, 0.0
  %vm404 = vcmp.eq.s32.totalorder %v242, 7
  %vm405 = vmand %vm365, %vm404
  %v406 = vsel %vm405, 1, 0
  %407 = vset.pattern.permute.xlu0 0
  %408 = vperm.xlu0 %407, %v406
  %v409 = vpop.permute.xlu0 %408
  %vm410 = vcmp.eq.s32.totalorder %v409, 1
  %v411 = vsel %vm410, %v363, 0.0
  %413 = vrot.lane.b32.xlu0 %v371, 64
  %v414 = vpop.permute.xlu0 %413
  %417 = vrot.lane.b32.xlu0 %v378, 96
  %v418 = vpop.permute.xlu0 %417
  %vm420 = vcmask 261120
  %v421 = vsel %vm420, %v414, %v418
  %v423 = vsel %vm243, %v421, 0
  %425 = vmatprep.subr.mxu0 0.0
  %426 = vmatpush1.msra.mxu0 0.0
  %427 = vmatprep.subr.mxu0 0.0
  %428 = vmatpush1.msra.mxu0 0.0
  %429 = vmatprep.subr.mxu0 0.0
  %430 = vmatpush1.msra.mxu0 0.0
  %431 = vmatprep.subr.mxu0 0.0
  %432 = vmatpush1.msra.mxu0 0.0
  %433 = vmatprep.subr.mxu0 0.0
  %434 = vmatpush1.msra.mxu0 0.0
  %435 = vmatprep.subr.mxu0 0.0
  %436 = vmatpush1.msra.mxu0 0.0
  %437 = vmatprep.subr.mxu0 0.0
  %438 = vmatpush1.msra.mxu0 0.0
  %439 = vmatprep.subr.mxu0 0.0
  %440 = vmatpush1.msra.mxu0 0.0
  %441 = vmatprep.subr.mxu0 %v237
  %442 = vmatpush1.msra.mxu0 %v236
  %443 = vmatprep.subr.mxu0 %v235
  %444 = vmatpush1.msra.mxu0 %v234
  %445 = vmatprep.subr.mxu0 %v233
  %446 = vmatpush1.msra.mxu0 %v232
  %447 = vmatprep.subr.mxu0 %v231
  %448 = vmatpush1.msra.mxu0 %v230
  %449 = vmatprep.subr.mxu0 %v229
  %450 = vmatpush1.msra.mxu0 %v228
  %451 = vmatprep.subr.mxu0 %v227
  %452 = vmatpush1.msra.mxu0 %v226
  %453 = vmatprep.subr.mxu0 %v225
  %454 = vmatpush1.msra.mxu0 %v224
  %455 = vmatprep.subr.mxu0 %v223
  %456 = vmatpush1.msra.mxu0 %v222
  %457 = vmatprep.subr.mxu0 0.0
  %458 = vmatpush2.msra.mxu0 0.0
  %459 = vmatprep.subr.mxu0 0.0
  %460 = vmatpush2.msra.mxu0 0.0
  %461 = vmatprep.subr.mxu0 0.0
  %462 = vmatpush2.msra.mxu0 0.0
  %463 = vmatprep.subr.mxu0 0.0
  %464 = vmatpush2.msra.mxu0 0.0
  %465 = vmatprep.subr.mxu0 0.0
  %466 = vmatpush2.msra.mxu0 0.0
  %467 = vmatprep.subr.mxu0 0.0
  %468 = vmatpush2.msra.mxu0 0.0
  %469 = vmatprep.subr.mxu0 0.0
  %470 = vmatpush2.msra.mxu0 0.0
  %471 = vmatprep.subr.mxu0 0.0
  %472 = vmatpush2.msra.mxu0 0.0
  %473 = vmatprep.subr.mxu0 0.0
  %474 = vmatpush2.msra.mxu0 0.0
  %475 = vmatprep.subr.mxu0 0.0
  %476 = vmatpush2.msra.mxu0 0.0
  %477 = vmatprep.subr.mxu0 0.0
  %478 = vmatpush2.msra.mxu0 0.0
  %479 = vmatprep.subr.mxu0 0.0
  %480 = vmatpush2.msra.mxu0 0.0
  %481 = vmatprep.subr.mxu0 0.0
  %482 = vmatpush2.msra.mxu0 0.0
  %483 = vmatprep.subr.mxu0 0.0
  %484 = vmatpush2.msra.mxu0 0.0
  %485 = vmatprep.subr.mxu0 0.0
  %486 = vmatpush2.msra.mxu0 0.0
  %487 = vmatprep.subr.mxu0 0.0
  %488 = vmatpush2.msra.mxu0 0.0
  %489 = vmatprep.mubr.f32.mxu0 0.0
  %490 = vmatmul.mubr.f32.gmra.mxu0 %v423
  %v491 = vpop.f32.mrf.mxu0
  %v492 = vadd.f32 0.0, %v491
  %v493 = vpop.f32.mrf.mxu0
  %v494 = vadd.f32 0.0, %v493
  %495 = vdwg.mxu0
  %v496 = vadd.f32 %v182, %v492
  %v497 = vadd.f32 %v214, %v494
  %v498 = vmul.f32 %v496, 0.5
  %v499 = vtanh.pop %v498
  %v500 = vadd.f32 %v499, 1.0
  %v501 = vmul.f32 %v500, 0.5
  %v502 = vtanh.pop %v496
  %v503 = vmul.f32 %v497, 0.5
  %v504 = vtanh.pop %v503
  %v505 = vadd.f32 %v504, 1.0
  %v506 = vmul.f32 %v505, 0.5
  %v507 = vtanh.pop %v497
  %v508 = vmul.f32 %v501, %v372
  %510 = vrot.lane.b32.xlu0 %v502, 32
  %v511 = vpop.permute.xlu0 %510
  %v513 = vmul.f32 %v501, %v511
  %515 = vrot.lane.b32.xlu0 %v513, 32
  %v516 = vpop.permute.xlu0 %515
  %v518 = vadd.f32 %v508, %v516
  %v519 = vtanh.pop %v518
  %521 = vrot.lane.b32.xlu0 %v519, 32
  %v522 = vpop.permute.xlu0 %521
  %v524 = vmul.f32 %v501, %v522
  %v525 = vmul.f32 %v506, %v379
  %527 = vrot.lane.b32.xlu0 %v507, 32
  %v528 = vpop.permute.xlu0 %527
  %v530 = vmul.f32 %v506, %v528
  %532 = vrot.lane.b32.xlu0 %v530, 32
  %v533 = vpop.permute.xlu0 %532
  %v535 = vadd.f32 %v525, %v533
  %v536 = vtanh.pop %v535
  %538 = vrot.lane.b32.xlu0 %v536, 32
  %v539 = vpop.permute.xlu0 %538
  %v541 = vmul.f32 %v506, %v539
  %vm542 = vcmp.gt.s32.totalorder %v238, 1
  %vm543 = vcmp.gt.s32.totalorder %v238, 6
  %v544 = vsel %vm542, 1, 0
  %545 = vset.pattern.permute.xlu0 0
  %546 = vperm.xlu0 %545, %v544
  %v547 = vpop.permute.xlu0 %546
  %vm548 = vcmp.eq.s32.totalorder %v547, 1
  %v549 = vsel %vm548, %v524, %v371
  %v550 = vsel %vm548, %v518, %v372
  %v551 = vsel %vm543, 1, 0
  %552 = vset.pattern.permute.xlu0 0
  %553 = vperm.xlu0 %552, %v551
  %v554 = vpop.permute.xlu0 %553
  %vm555 = vcmp.eq.s32.totalorder %v554, 1
  %v556 = vsel %vm555, %v541, %v378
  %v557 = vsel %vm555, %v535, %v379
  %vm558 = vcmp.eq.s32.totalorder %v239, 1
  %vm559 = vmand %vm542, %vm558
  %v560 = vsel %vm559, 1, 0
  %561 = vset.pattern.permute.xlu0 0
  %562 = vperm.xlu0 %561, %v560
  %v563 = vpop.permute.xlu0 %562
  %vm564 = vcmp.eq.s32.totalorder %v563, 1
  %v565 = vsel %vm564, %v524, %v387
  %vm566 = vcmp.eq.s32.totalorder %v241, 1
  %vm567 = vmand %vm542, %vm566
  %v568 = vsel %vm567, 1, 0
  %569 = vset.pattern.permute.xlu0 0
  %570 = vperm.xlu0 %569, %v568
  %v571 = vpop.permute.xlu0 %570
  %vm572 = vcmp.eq.s32.totalorder %v571, 1
  %v573 = vsel %vm572, %v524, %v395
  %vm574 = vcmp.eq.s32.totalorder %v240, 6
  %vm575 = vmand %vm543, %vm574
  %v576 = vsel %vm575, 1, 0
  %577 = vset.pattern.permute.xlu0 0
  %578 = vperm.xlu0 %577, %v576
  %v579 = vpop.permute.xlu0 %578
  %vm580 = vcmp.eq.s32.totalorder %v579, 1
  %v581 = vsel %vm580, %v541, %v403
  %vm582 = vcmp.eq.s32.totalorder %v242, 6
  %vm583 = vmand %vm543, %vm582
  %v584 = vsel %vm583, 1, 0
  %585 = vset.pattern.permute.xlu0 0
  %586 = vperm.xlu0 %585, %v584
  %v587 = vpop.permute.xlu0 %586
  %vm588 = vcmp.eq.s32.totalorder %v587, 1
  %v589 = vsel %vm588, %v541, %v411
  %591 = vrot.lane.b32.xlu0 %v549, 64
  %v592 = vpop.permute.xlu0 %591
  %595 = vrot.lane.b32.xlu0 %v556, 96
  %v596 = vpop.permute.xlu0 %595
  %v598 = vsel %vm420, %v592, %v596
  %v600 = vsel %vm243, %v598, 0
  %602 = vmatprep.subr.mxu0 0.0
  %603 = vmatpush1.msra.mxu0 0.0
  %604 = vmatprep.subr.mxu0 0.0
  %605 = vmatpush1.msra.mxu0 0.0
  %606 = vmatprep.subr.mxu0 0.0
  %607 = vmatpush1.msra.mxu0 0.0
  %608 = vmatprep.subr.mxu0 0.0
  %609 = vmatpush1.msra.mxu0 0.0
  %610 = vmatprep.subr.mxu0 0.0
  %611 = vmatpush1.msra.mxu0 0.0
  %612 = vmatprep.subr.mxu0 0.0
  %613 = vmatpush1.msra.mxu0 0.0
  %614 = vmatprep.subr.mxu0 0.0
  %615 = vmatpush1.msra.mxu0 0.0
  %616 = vmatprep.subr.mxu0 0.0
  %617 = vmatpush1.msra.mxu0 0.0
  %618 = vmatprep.subr.mxu0 %v237
  %619 = vmatpush1.msra.mxu0 %v236
  %620 = vmatprep.subr.mxu0 %v235
  %621 = vmatpush1.msra.mxu0 %v234
  %622 = vmatprep.subr.mxu0 %v233
  %623 = vmatpush1.msra.mxu0 %v232
  %624 = vmatprep.subr.mxu0 %v231
  %625 = vmatpush1.msra.mxu0 %v230
  %626 = vmatprep.subr.mxu0 %v229
  %627 = vmatpush1.msra.mxu0 %v228
  %628 = vmatprep.subr.mxu0 %v227
  %629 = vmatpush1.msra.mxu0 %v226
  %630 = vmatprep.subr.mxu0 %v225
  %631 = vmatpush1.msra.mxu0 %v224
  %632 = vmatprep.subr.mxu0 %v223
  %633 = vmatpush1.msra.mxu0 %v222
  %634 = vmatprep.subr.mxu0 0.0
  %635 = vmatpush2.msra.mxu0 0.0
  %636 = vmatprep.subr.mxu0 0.0
  %637 = vmatpush2.msra.mxu0 0.0
  %638 = vmatprep.subr.mxu0 0.0
  %639 = vmatpush2.msra.mxu0 0.0
  %640 = vmatprep.subr.mxu0 0.0
  %641 = vmatpush2.msra.mxu0 0.0
  %642 = vmatprep.subr.mxu0 0.0
  %643 = vmatpush2.msra.mxu0 0.0
  %644 = vmatprep.subr.mxu0 0.0
  %645 = vmatpush2.msra.mxu0 0.0
  %646 = vmatprep.subr.mxu0 0.0
  %647 = vmatpush2.msra.mxu0 0.0
  %648 = vmatprep.subr.mxu0 0.0
  %649 = vmatpush2.msra.mxu0 0.0
  %650 = vmatprep.subr.mxu0 0.0
  %651 = vmatpush2.msra.mxu0 0.0
  %652 = vmatprep.subr.mxu0 0.0
  %653 = vmatpush2.msra.mxu0 0.0
  %654 = vmatprep.subr.mxu0 0.0
  %655 = vmatpush2.msra.mxu0 0.0
  %656 = vmatprep.subr.mxu0 0.0
  %657 = vmatpush2.msra.mxu0 0.0
  %658 = vmatprep.subr.mxu0 0.0
  %659 = vmatpush2.msra.mxu0 0.0
  %660 = vmatprep.subr.mxu0 0.0
  %661 = vmatpush2.msra.mxu0 0.0
  %662 = vmatprep.subr.mxu0 0.0
  %663 = vmatpush2.msra.mxu0 0.0
  %664 = vmatprep.subr.mxu0 0.0
  %665 = vmatpush2.msra.mxu0 0.0
  %666 = vmatprep.mubr.f32.mxu0 0.0
  %667 = vmatmul.mubr.f32.gmra.mxu0 %v600
  %v668 = vpop.f32.mrf.mxu0
  %v669 = vadd.f32 0.0, %v668
  %v670 = vpop.f32.mrf.mxu0
  %v671 = vadd.f32 0.0, %v670
  %672 = vdwg.mxu0
  %v673 = vadd.f32 %v188, %v669
  %v674 = vadd.f32 %v208, %v671
  %v675 = vmul.f32 %v673, 0.5
  %v676 = vtanh.pop %v675
  %v677 = vadd.f32 %v676, 1.0
  %v678 = vmul.f32 %v677, 0.5
  %v679 = vtanh.pop %v673
  %v680 = vmul.f32 %v674, 0.5
  %v681 = vtanh.pop %v680
  %v682 = vadd.f32 %v681, 1.0
  %v683 = vmul.f32 %v682, 0.5
  %v684 = vtanh.pop %v674
  %v685 = vmul.f32 %v678, %v550
  %687 = vrot.lane.b32.xlu0 %v679, 32
  %v688 = vpop.permute.xlu0 %687
  %v690 = vmul.f32 %v678, %v688
  %692 = vrot.lane.b32.xlu0 %v690, 32
  %v693 = vpop.permute.xlu0 %692
  %v695 = vadd.f32 %v685, %v693
  %v696 = vtanh.pop %v695
  %698 = vrot.lane.b32.xlu0 %v696, 32
  %v699 = vpop.permute.xlu0 %698
  %v701 = vmul.f32 %v678, %v699
  %v702 = vmul.f32 %v683, %v557
  %704 = vrot.lane.b32.xlu0 %v684, 32
  %v705 = vpop.permute.xlu0 %704
  %v707 = vmul.f32 %v683, %v705
  %709 = vrot.lane.b32.xlu0 %v707, 32
  %v710 = vpop.permute.xlu0 %709
  %v712 = vadd.f32 %v702, %v710
  %v713 = vtanh.pop %v712
  %715 = vrot.lane.b32.xlu0 %v713, 32
  %v716 = vpop.permute.xlu0 %715
  %v718 = vmul.f32 %v683, %v716
  %vm719 = vcmp.gt.s32.totalorder %v238, 2
  %vm720 = vcmp.gt.s32.totalorder %v238, 5
  %v721 = vsel %vm719, 1, 0
  %722 = vset.pattern.permute.xlu0 0
  %723 = vperm.xlu0 %722, %v721
  %v724 = vpop.permute.xlu0 %723
  %vm725 = vcmp.eq.s32.totalorder %v724, 1
  %v726 = vsel %vm725, %v701, %v549
  %v727 = vsel %vm725, %v695, %v550
  %v728 = vsel %vm720, 1, 0
  %729 = vset.pattern.permute.xlu0 0
  %730 = vperm.xlu0 %729, %v728
  %v731 = vpop.permute.xlu0 %730
  %vm732 = vcmp.eq.s32.totalorder %v731, 1
  %v733 = vsel %vm732, %v718, %v556
  %v734 = vsel %vm732, %v712, %v557
  %vm735 = vcmp.eq.s32.totalorder %v239, 2
  %vm736 = vmand %vm719, %vm735
  %v737 = vsel %vm736, 1, 0
  %738 = vset.pattern.permute.xlu0 0
  %739 = vperm.xlu0 %738, %v737
  %v740 = vpop.permute.xlu0 %739
  %vm741 = vcmp.eq.s32.totalorder %v740, 1
  %v742 = vsel %vm741, %v701, %v565
  %vm743 = vcmp.eq.s32.totalorder %v241, 2
  %vm744 = vmand %vm719, %vm743
  %v745 = vsel %vm744, 1, 0
  %746 = vset.pattern.permute.xlu0 0
  %747 = vperm.xlu0 %746, %v745
  %v748 = vpop.permute.xlu0 %747
  %vm749 = vcmp.eq.s32.totalorder %v748, 1
  %v750 = vsel %vm749, %v701, %v573
  %vm751 = vcmp.eq.s32.totalorder %v240, 5
  %vm752 = vmand %vm720, %vm751
  %v753 = vsel %vm752, 1, 0
  %754 = vset.pattern.permute.xlu0 0
  %755 = vperm.xlu0 %754, %v753
  %v756 = vpop.permute.xlu0 %755
  %vm757 = vcmp.eq.s32.totalorder %v756, 1
  %v758 = vsel %vm757, %v718, %v581
  %vm759 = vcmp.eq.s32.totalorder %v242, 5
  %vm760 = vmand %vm720, %vm759
  %v761 = vsel %vm760, 1, 0
  %762 = vset.pattern.permute.xlu0 0
  %763 = vperm.xlu0 %762, %v761
  %v764 = vpop.permute.xlu0 %763
  %vm765 = vcmp.eq.s32.totalorder %v764, 1
  %v766 = vsel %vm765, %v718, %v589
  %768 = vrot.lane.b32.xlu0 %v726, 64
  %v769 = vpop.permute.xlu0 %768
  %772 = vrot.lane.b32.xlu0 %v733, 96
  %v773 = vpop.permute.xlu0 %772
  %v775 = vsel %vm420, %v769, %v773
  %v777 = vsel %vm243, %v775, 0
  %779 = vmatprep.subr.mxu0 0.0
  %780 = vmatpush1.msra.mxu0 0.0
  %781 = vmatprep.subr.mxu0 0.0
  %782 = vmatpush1.msra.mxu0 0.0
  %783 = vmatprep.subr.mxu0 0.0
  %784 = vmatpush1.msra.mxu0 0.0
  %785 = vmatprep.subr.mxu0 0.0
  %786 = vmatpush1.msra.mxu0 0.0
  %787 = vmatprep.subr.mxu0 0.0
  %788 = vmatpush1.msra.mxu0 0.0
  %789 = vmatprep.subr.mxu0 0.0
  %790 = vmatpush1.msra.mxu0 0.0
  %791 = vmatprep.subr.mxu0 0.0
  %792 = vmatpush1.msra.mxu0 0.0
  %793 = vmatprep.subr.mxu0 0.0
  %794 = vmatpush1.msra.mxu0 0.0
  %795 = vmatprep.subr.mxu0 %v237
  %796 = vmatpush1.msra.mxu0 %v236
  %797 = vmatprep.subr.mxu0 %v235
  %798 = vmatpush1.msra.mxu0 %v234
  %799 = vmatprep.subr.mxu0 %v233
  %800 = vmatpush1.msra.mxu0 %v232
  %801 = vmatprep.subr.mxu0 %v231
  %802 = vmatpush1.msra.mxu0 %v230
  %803 = vmatprep.subr.mxu0 %v229
  %804 = vmatpush1.msra.mxu0 %v228
  %805 = vmatprep.subr.mxu0 %v227
  %806 = vmatpush1.msra.mxu0 %v226
  %807 = vmatprep.subr.mxu0 %v225
  %808 = vmatpush1.msra.mxu0 %v224
  %809 = vmatprep.subr.mxu0 %v223
  %810 = vmatpush1.msra.mxu0 %v222
  %811 = vmatprep.subr.mxu0 0.0
  %812 = vmatpush2.msra.mxu0 0.0
  %813 = vmatprep.subr.mxu0 0.0
  %814 = vmatpush2.msra.mxu0 0.0
  %815 = vmatprep.subr.mxu0 0.0
  %816 = vmatpush2.msra.mxu0 0.0
  %817 = vmatprep.subr.mxu0 0.0
  %818 = vmatpush2.msra.mxu0 0.0
  %819 = vmatprep.subr.mxu0 0.0
  %820 = vmatpush2.msra.mxu0 0.0
  %821 = vmatprep.subr.mxu0 0.0
  %822 = vmatpush2.msra.mxu0 0.0
  %823 = vmatprep.subr.mxu0 0.0
  %824 = vmatpush2.msra.mxu0 0.0
  %825 = vmatprep.subr.mxu0 0.0
  %826 = vmatpush2.msra.mxu0 0.0
  %827 = vmatprep.subr.mxu0 0.0
  %828 = vmatpush2.msra.mxu0 0.0
  %829 = vmatprep.subr.mxu0 0.0
  %830 = vmatpush2.msra.mxu0 0.0
  %831 = vmatprep.subr.mxu0 0.0
  %832 = vmatpush2.msra.mxu0 0.0
  %833 = vmatprep.subr.mxu0 0.0
  %834 = vmatpush2.msra.mxu0 0.0
  %835 = vmatprep.subr.mxu0 0.0
  %836 = vmatpush2.msra.mxu0 0.0
  %837 = vmatprep.subr.mxu0 0.0
  %838 = vmatpush2.msra.mxu0 0.0
  %839 = vmatprep.subr.mxu0 0.0
  %840 = vmatpush2.msra.mxu0 0.0
  %841 = vmatprep.subr.mxu0 0.0
  %842 = vmatpush2.msra.mxu0 0.0
  %843 = vmatprep.mubr.f32.mxu0 0.0
  %844 = vmatmul.mubr.f32.gmra.mxu0 %v777
  %v845 = vpop.f32.mrf.mxu0
  %v846 = vadd.f32 0.0, %v845
  %v847 = vpop.f32.mrf.mxu0
  %v848 = vadd.f32 0.0, %v847
  %849 = vdwg.mxu0
  %v850 = vadd.f32 %v194, %v846
  %v851 = vadd.f32 %v202, %v848
  %v852 = vmul.f32 %v850, 0.5
  %v853 = vtanh.pop %v852
  %v854 = vadd.f32 %v853, 1.0
  %v855 = vmul.f32 %v854, 0.5
  %v856 = vtanh.pop %v850
  %v857 = vmul.f32 %v851, 0.5
  %v858 = vtanh.pop %v857
  %v859 = vadd.f32 %v858, 1.0
  %v860 = vmul.f32 %v859, 0.5
  %v861 = vtanh.pop %v851
  %v862 = vmul.f32 %v855, %v727
  %864 = vrot.lane.b32.xlu0 %v856, 32
  %v865 = vpop.permute.xlu0 %864
  %v867 = vmul.f32 %v855, %v865
  %869 = vrot.lane.b32.xlu0 %v867, 32
  %v870 = vpop.permute.xlu0 %869
  %v872 = vadd.f32 %v862, %v870
  %v873 = vtanh.pop %v872
  %875 = vrot.lane.b32.xlu0 %v873, 32
  %v876 = vpop.permute.xlu0 %875
  %v878 = vmul.f32 %v855, %v876
  %v879 = vmul.f32 %v860, %v734
  %881 = vrot.lane.b32.xlu0 %v861, 32
  %v882 = vpop.permute.xlu0 %881
  %v884 = vmul.f32 %v860, %v882
  %886 = vrot.lane.b32.xlu0 %v884, 32
  %v887 = vpop.permute.xlu0 %886
  %v889 = vadd.f32 %v879, %v887
  %v890 = vtanh.pop %v889
  %892 = vrot.lane.b32.xlu0 %v890, 32
  %v893 = vpop.permute.xlu0 %892
  %v895 = vmul.f32 %v860, %v893
  %vm896 = vcmp.gt.s32.totalorder %v238, 3
  %vm897 = vcmp.gt.s32.totalorder %v238, 4
  %v898 = vsel %vm896, 1, 0
  %899 = vset.pattern.permute.xlu0 0
  %900 = vperm.xlu0 %899, %v898
  %v901 = vpop.permute.xlu0 %900
  %vm902 = vcmp.eq.s32.totalorder %v901, 1
  %v903 = vsel %vm902, %v878, %v726
  %v904 = vsel %vm902, %v872, %v727
  %v905 = vsel %vm897, 1, 0
  %906 = vset.pattern.permute.xlu0 0
  %907 = vperm.xlu0 %906, %v905
  %v908 = vpop.permute.xlu0 %907
  %vm909 = vcmp.eq.s32.totalorder %v908, 1
  %v910 = vsel %vm909, %v895, %v733
  %v911 = vsel %vm909, %v889, %v734
  %vm912 = vcmp.eq.s32.totalorder %v239, 3
  %vm913 = vmand %vm896, %vm912
  %v914 = vsel %vm913, 1, 0
  %915 = vset.pattern.permute.xlu0 0
  %916 = vperm.xlu0 %915, %v914
  %v917 = vpop.permute.xlu0 %916
  %vm918 = vcmp.eq.s32.totalorder %v917, 1
  %v919 = vsel %vm918, %v878, %v742
  %vm920 = vcmp.eq.s32.totalorder %v241, 3
  %vm921 = vmand %vm896, %vm920
  %v922 = vsel %vm921, 1, 0
  %923 = vset.pattern.permute.xlu0 0
  %924 = vperm.xlu0 %923, %v922
  %v925 = vpop.permute.xlu0 %924
  %vm926 = vcmp.eq.s32.totalorder %v925, 1
  %v927 = vsel %vm926, %v878, %v750
  %vm928 = vcmp.eq.s32.totalorder %v240, 4
  %vm929 = vmand %vm897, %vm928
  %v930 = vsel %vm929, 1, 0
  %931 = vset.pattern.permute.xlu0 0
  %932 = vperm.xlu0 %931, %v930
  %v933 = vpop.permute.xlu0 %932
  %vm934 = vcmp.eq.s32.totalorder %v933, 1
  %v935 = vsel %vm934, %v895, %v758
  %vm936 = vcmp.eq.s32.totalorder %v242, 4
  %vm937 = vmand %vm897, %vm936
  %v938 = vsel %vm937, 1, 0
  %939 = vset.pattern.permute.xlu0 0
  %940 = vperm.xlu0 %939, %v938
  %v941 = vpop.permute.xlu0 %940
  %vm942 = vcmp.eq.s32.totalorder %v941, 1
  %v943 = vsel %vm942, %v895, %v766
  %945 = vrot.lane.b32.xlu0 %v903, 64
  %v946 = vpop.permute.xlu0 %945
  %949 = vrot.lane.b32.xlu0 %v910, 96
  %v950 = vpop.permute.xlu0 %949
  %v952 = vsel %vm420, %v946, %v950
  %v954 = vsel %vm243, %v952, 0
  %956 = vmatprep.subr.mxu0 0.0
  %957 = vmatpush1.msra.mxu0 0.0
  %958 = vmatprep.subr.mxu0 0.0
  %959 = vmatpush1.msra.mxu0 0.0
  %960 = vmatprep.subr.mxu0 0.0
  %961 = vmatpush1.msra.mxu0 0.0
  %962 = vmatprep.subr.mxu0 0.0
  %963 = vmatpush1.msra.mxu0 0.0
  %964 = vmatprep.subr.mxu0 0.0
  %965 = vmatpush1.msra.mxu0 0.0
  %966 = vmatprep.subr.mxu0 0.0
  %967 = vmatpush1.msra.mxu0 0.0
  %968 = vmatprep.subr.mxu0 0.0
  %969 = vmatpush1.msra.mxu0 0.0
  %970 = vmatprep.subr.mxu0 0.0
  %971 = vmatpush1.msra.mxu0 0.0
  %972 = vmatprep.subr.mxu0 %v237
  %973 = vmatpush1.msra.mxu0 %v236
  %974 = vmatprep.subr.mxu0 %v235
  %975 = vmatpush1.msra.mxu0 %v234
  %976 = vmatprep.subr.mxu0 %v233
  %977 = vmatpush1.msra.mxu0 %v232
  %978 = vmatprep.subr.mxu0 %v231
  %979 = vmatpush1.msra.mxu0 %v230
  %980 = vmatprep.subr.mxu0 %v229
  %981 = vmatpush1.msra.mxu0 %v228
  %982 = vmatprep.subr.mxu0 %v227
  %983 = vmatpush1.msra.mxu0 %v226
  %984 = vmatprep.subr.mxu0 %v225
  %985 = vmatpush1.msra.mxu0 %v224
  %986 = vmatprep.subr.mxu0 %v223
  %987 = vmatpush1.msra.mxu0 %v222
  %988 = vmatprep.subr.mxu0 0.0
  %989 = vmatpush2.msra.mxu0 0.0
  %990 = vmatprep.subr.mxu0 0.0
  %991 = vmatpush2.msra.mxu0 0.0
  %992 = vmatprep.subr.mxu0 0.0
  %993 = vmatpush2.msra.mxu0 0.0
  %994 = vmatprep.subr.mxu0 0.0
  %995 = vmatpush2.msra.mxu0 0.0
  %996 = vmatprep.subr.mxu0 0.0
  %997 = vmatpush2.msra.mxu0 0.0
  %998 = vmatprep.subr.mxu0 0.0
  %999 = vmatpush2.msra.mxu0 0.0
  %1000 = vmatprep.subr.mxu0 0.0
  %1001 = vmatpush2.msra.mxu0 0.0
  %1002 = vmatprep.subr.mxu0 0.0
  %1003 = vmatpush2.msra.mxu0 0.0
  %1004 = vmatprep.subr.mxu0 0.0
  %1005 = vmatpush2.msra.mxu0 0.0
  %1006 = vmatprep.subr.mxu0 0.0
  %1007 = vmatpush2.msra.mxu0 0.0
  %1008 = vmatprep.subr.mxu0 0.0
  %1009 = vmatpush2.msra.mxu0 0.0
  %1010 = vmatprep.subr.mxu0 0.0
  %1011 = vmatpush2.msra.mxu0 0.0
  %1012 = vmatprep.subr.mxu0 0.0
  %1013 = vmatpush2.msra.mxu0 0.0
  %1014 = vmatprep.subr.mxu0 0.0
  %1015 = vmatpush2.msra.mxu0 0.0
  %1016 = vmatprep.subr.mxu0 0.0
  %1017 = vmatpush2.msra.mxu0 0.0
  %1018 = vmatprep.subr.mxu0 0.0
  %1019 = vmatpush2.msra.mxu0 0.0
  %1020 = vmatprep.mubr.f32.mxu0 0.0
  %1021 = vmatmul.mubr.f32.gmra.mxu0 %v954
  %v1022 = vpop.f32.mrf.mxu0
  %v1023 = vadd.f32 0.0, %v1022
  %v1024 = vpop.f32.mrf.mxu0
  %v1025 = vadd.f32 0.0, %v1024
  %1026 = vdwg.mxu0
  %v1027 = vadd.f32 %v200, %v1023
  %v1028 = vadd.f32 %v196, %v1025
  %v1029 = vmul.f32 %v1027, 0.5
  %v1030 = vtanh.pop %v1029
  %v1031 = vadd.f32 %v1030, 1.0
  %v1032 = vmul.f32 %v1031, 0.5
  %v1033 = vtanh.pop %v1027
  %v1034 = vmul.f32 %v1028, 0.5
  %v1035 = vtanh.pop %v1034
  %v1036 = vadd.f32 %v1035, 1.0
  %v1037 = vmul.f32 %v1036, 0.5
  %v1038 = vtanh.pop %v1028
  %v1039 = vmul.f32 %v1032, %v904
  %1041 = vrot.lane.b32.xlu0 %v1033, 32
  %v1042 = vpop.permute.xlu0 %1041
  %v1044 = vmul.f32 %v1032, %v1042
  %1046 = vrot.lane.b32.xlu0 %v1044, 32
  %v1047 = vpop.permute.xlu0 %1046
  %v1049 = vadd.f32 %v1039, %v1047
  %v1050 = vtanh.pop %v1049
  %1052 = vrot.lane.b32.xlu0 %v1050, 32
  %v1053 = vpop.permute.xlu0 %1052
  %v1055 = vmul.f32 %v1032, %v1053
  %v1056 = vmul.f32 %v1037, %v911
  %1058 = vrot.lane.b32.xlu0 %v1038, 32
  %v1059 = vpop.permute.xlu0 %1058
  %v1061 = vmul.f32 %v1037, %v1059
  %1063 = vrot.lane.b32.xlu0 %v1061, 32
  %v1064 = vpop.permute.xlu0 %1063
  %v1066 = vadd.f32 %v1056, %v1064
  %v1067 = vtanh.pop %v1066
  %1069 = vrot.lane.b32.xlu0 %v1067, 32
  %v1070 = vpop.permute.xlu0 %1069
  %v1072 = vmul.f32 %v1037, %v1070
  %v1073 = vsel %vm909, %v1055, %v903
  %v1074 = vsel %vm909, %v1049, %v904
  %v1075 = vsel %vm902, %v1072, %v910
  %v1076 = vsel %vm902, %v1066, %v911
  %vm1077 = vcmp.eq.s32.totalorder %v239, 4
  %vm1078 = vmand %vm897, %vm1077
  %v1079 = vsel %vm1078, 1, 0
  %1080 = vset.pattern.permute.xlu0 0
  %1081 = vperm.xlu0 %1080, %v1079
  %v1082 = vpop.permute.xlu0 %1081
  %vm1083 = vcmp.eq.s32.totalorder %v1082, 1
  %v1084 = vsel %vm1083, %v1055, %v919
  %vm1085 = vcmp.eq.s32.totalorder %v241, 4
  %vm1086 = vmand %vm897, %vm1085
  %v1087 = vsel %vm1086, 1, 0
  %1088 = vset.pattern.permute.xlu0 0
  %1089 = vperm.xlu0 %1088, %v1087
  %v1090 = vpop.permute.xlu0 %1089
  %vm1091 = vcmp.eq.s32.totalorder %v1090, 1
  %v1092 = vsel %vm1091, %v1055, %v927
  %vm1093 = vcmp.eq.s32.totalorder %v240, 3
  %vm1094 = vmand %vm896, %vm1093
  %v1095 = vsel %vm1094, 1, 0
  %1096 = vset.pattern.permute.xlu0 0
  %1097 = vperm.xlu0 %1096, %v1095
  %v1098 = vpop.permute.xlu0 %1097
  %vm1099 = vcmp.eq.s32.totalorder %v1098, 1
  %v1100 = vsel %vm1099, %v1072, %v935
  %vm1101 = vcmp.eq.s32.totalorder %v242, 3
  %vm1102 = vmand %vm896, %vm1101
  %v1103 = vsel %vm1102, 1, 0
  %1104 = vset.pattern.permute.xlu0 0
  %1105 = vperm.xlu0 %1104, %v1103
  %v1106 = vpop.permute.xlu0 %1105
  %vm1107 = vcmp.eq.s32.totalorder %v1106, 1
  %v1108 = vsel %vm1107, %v1072, %v943
  %1110 = vrot.lane.b32.xlu0 %v1073, 64
  %v1111 = vpop.permute.xlu0 %1110
  %1114 = vrot.lane.b32.xlu0 %v1075, 96
  %v1115 = vpop.permute.xlu0 %1114
  %v1117 = vsel %vm420, %v1111, %v1115
  %v1119 = vsel %vm243, %v1117, 0
  %1121 = vmatprep.subr.mxu0 0.0
  %1122 = vmatpush1.msra.mxu0 0.0
  %1123 = vmatprep.subr.mxu0 0.0
  %1124 = vmatpush1.msra.mxu0 0.0
  %1125 = vmatprep.subr.mxu0 0.0
  %1126 = vmatpush1.msra.mxu0 0.0
  %1127 = vmatprep.subr.mxu0 0.0
  %1128 = vmatpush1.msra.mxu0 0.0
  %1129 = vmatprep.subr.mxu0 0.0
  %1130 = vmatpush1.msra.mxu0 0.0
  %1131 = vmatprep.subr.mxu0 0.0
  %1132 = vmatpush1.msra.mxu0 0.0
  %1133 = vmatprep.subr.mxu0 0.0
  %1134 = vmatpush1.msra.mxu0 0.0
  %1135 = vmatprep.subr.mxu0 0.0
  %1136 = vmatpush1.msra.mxu0 0.0
  %1137 = vmatprep.subr.mxu0 %v237
  %1138 = vmatpush1.msra.mxu0 %v236
  %1139 = vmatprep.subr.mxu0 %v235
  %1140 = vmatpush1.msra.mxu0 %v234
  %1141 = vmatprep.subr.mxu0 %v233
  %1142 = vmatpush1.msra.mxu0 %v232
  %1143 = vmatprep.subr.mxu0 %v231
  %1144 = vmatpush1.msra.mxu0 %v230
  %1145 = vmatprep.subr.mxu0 %v229
  %1146 = vmatpush1.msra.mxu0 %v228
  %1147 = vmatprep.subr.mxu0 %v227
  %1148 = vmatpush1.msra.mxu0 %v226
  %1149 = vmatprep.subr.mxu0 %v225
  %1150 = vmatpush1.msra.mxu0 %v224
  %1151 = vmatprep.subr.mxu0 %v223
  %1152 = vmatpush1.msra.mxu0 %v222
  %1153 = vmatprep.subr.mxu0 0.0
  %1154 = vmatpush2.msra.mxu0 0.0
  %1155 = vmatprep.subr.mxu0 0.0
  %1156 = vmatpush2.msra.mxu0 0.0
  %1157 = vmatprep.subr.mxu0 0.0
  %1158 = vmatpush2.msra.mxu0 0.0
  %1159 = vmatprep.subr.mxu0 0.0
  %1160 = vmatpush2.msra.mxu0 0.0
  %1161 = vmatprep.subr.mxu0 0.0
  %1162 = vmatpush2.msra.mxu0 0.0
  %1163 = vmatprep.subr.mxu0 0.0
  %1164 = vmatpush2.msra.mxu0 0.0
  %1165 = vmatprep.subr.mxu0 0.0
  %1166 = vmatpush2.msra.mxu0 0.0
  %1167 = vmatprep.subr.mxu0 0.0
  %1168 = vmatpush2.msra.mxu0 0.0
  %1169 = vmatprep.subr.mxu0 0.0
  %1170 = vmatpush2.msra.mxu0 0.0
  %1171 = vmatprep.subr.mxu0 0.0
  %1172 = vmatpush2.msra.mxu0 0.0
  %1173 = vmatprep.subr.mxu0 0.0
  %1174 = vmatpush2.msra.mxu0 0.0
  %1175 = vmatprep.subr.mxu0 0.0
  %1176 = vmatpush2.msra.mxu0 0.0
  %1177 = vmatprep.subr.mxu0 0.0
  %1178 = vmatpush2.msra.mxu0 0.0
  %1179 = vmatprep.subr.mxu0 0.0
  %1180 = vmatpush2.msra.mxu0 0.0
  %1181 = vmatprep.subr.mxu0 0.0
  %1182 = vmatpush2.msra.mxu0 0.0
  %1183 = vmatprep.subr.mxu0 0.0
  %1184 = vmatpush2.msra.mxu0 0.0
  %1185 = vmatprep.mubr.f32.mxu0 0.0
  %1186 = vmatmul.mubr.f32.gmra.mxu0 %v1119
  %v1187 = vpop.f32.mrf.mxu0
  %v1188 = vadd.f32 0.0, %v1187
  %v1189 = vpop.f32.mrf.mxu0
  %v1190 = vadd.f32 0.0, %v1189
  %1191 = vdwg.mxu0
  %v1192 = vadd.f32 %v206, %v1188
  %v1193 = vadd.f32 %v190, %v1190
  %v1194 = vmul.f32 %v1192, 0.5
  %v1195 = vtanh.pop %v1194
  %v1196 = vadd.f32 %v1195, 1.0
  %v1197 = vmul.f32 %v1196, 0.5
  %v1198 = vtanh.pop %v1192
  %v1199 = vmul.f32 %v1193, 0.5
  %v1200 = vtanh.pop %v1199
  %v1201 = vadd.f32 %v1200, 1.0
  %v1202 = vmul.f32 %v1201, 0.5
  %v1203 = vtanh.pop %v1193
  %v1204 = vmul.f32 %v1197, %v1074
  %1206 = vrot.lane.b32.xlu0 %v1198, 32
  %v1207 = vpop.permute.xlu0 %1206
  %v1209 = vmul.f32 %v1197, %v1207
  %1211 = vrot.lane.b32.xlu0 %v1209, 32
  %v1212 = vpop.permute.xlu0 %1211
  %v1214 = vadd.f32 %v1204, %v1212
  %v1215 = vtanh.pop %v1214
  %1217 = vrot.lane.b32.xlu0 %v1215, 32
  %v1218 = vpop.permute.xlu0 %1217
  %v1220 = vmul.f32 %v1197, %v1218
  %v1221 = vmul.f32 %v1202, %v1076
  %1223 = vrot.lane.b32.xlu0 %v1203, 32
  %v1224 = vpop.permute.xlu0 %1223
  %v1226 = vmul.f32 %v1202, %v1224
  %1228 = vrot.lane.b32.xlu0 %v1226, 32
  %v1229 = vpop.permute.xlu0 %1228
  %v1231 = vadd.f32 %v1221, %v1229
  %v1232 = vtanh.pop %v1231
  %1234 = vrot.lane.b32.xlu0 %v1232, 32
  %v1235 = vpop.permute.xlu0 %1234
  %v1237 = vmul.f32 %v1202, %v1235
  %v1238 = vsel %vm732, %v1220, %v1073
  %v1239 = vsel %vm732, %v1214, %v1074
  %v1240 = vsel %vm725, %v1237, %v1075
  %v1241 = vsel %vm725, %v1231, %v1076
  %vm1242 = vcmp.eq.s32.totalorder %v239, 5
  %vm1243 = vmand %vm720, %vm1242
  %v1244 = vsel %vm1243, 1, 0
  %1245 = vset.pattern.permute.xlu0 0
  %1246 = vperm.xlu0 %1245, %v1244
  %v1247 = vpop.permute.xlu0 %1246
  %vm1248 = vcmp.eq.s32.totalorder %v1247, 1
  %v1249 = vsel %vm1248, %v1220, %v1084
  %vm1250 = vcmp.eq.s32.totalorder %v241, 5
  %vm1251 = vmand %vm720, %vm1250
  %v1252 = vsel %vm1251, 1, 0
  %1253 = vset.pattern.permute.xlu0 0
  %1254 = vperm.xlu0 %1253, %v1252
  %v1255 = vpop.permute.xlu0 %1254
  %vm1256 = vcmp.eq.s32.totalorder %v1255, 1
  %v1257 = vsel %vm1256, %v1220, %v1092
  %vm1258 = vcmp.eq.s32.totalorder %v240, 2
  %vm1259 = vmand %vm719, %vm1258
  %v1260 = vsel %vm1259, 1, 0
  %1261 = vset.pattern.permute.xlu0 0
  %1262 = vperm.xlu0 %1261, %v1260
  %v1263 = vpop.permute.xlu0 %1262
  %vm1264 = vcmp.eq.s32.totalorder %v1263, 1
  %v1265 = vsel %vm1264, %v1237, %v1100
  %vm1266 = vcmp.eq.s32.totalorder %v242, 2
  %vm1267 = vmand %vm719, %vm1266
  %v1268 = vsel %vm1267, 1, 0
  %1269 = vset.pattern.permute.xlu0 0
  %1270 = vperm.xlu0 %1269, %v1268
  %v1271 = vpop.permute.xlu0 %1270
  %vm1272 = vcmp.eq.s32.totalorder %v1271, 1
  %v1273 = vsel %vm1272, %v1237, %v1108
  %1275 = vrot.lane.b32.xlu0 %v1238, 64
  %v1276 = vpop.permute.xlu0 %1275
  %1279 = vrot.lane.b32.xlu0 %v1240, 96
  %v1280 = vpop.permute.xlu0 %1279
  %v1282 = vsel %vm420, %v1276, %v1280
  %v1284 = vsel %vm243, %v1282, 0
  %1286 = vmatprep.subr.mxu0 0.0
  %1287 = vmatpush1.msra.mxu0 0.0
  %1288 = vmatprep.subr.mxu0 0.0
  %1289 = vmatpush1.msra.mxu0 0.0
  %1290 = vmatprep.subr.mxu0 0.0
  %1291 = vmatpush1.msra.mxu0 0.0
  %1292 = vmatprep.subr.mxu0 0.0
  %1293 = vmatpush1.msra.mxu0 0.0
  %1294 = vmatprep.subr.mxu0 0.0
  %1295 = vmatpush1.msra.mxu0 0.0
  %1296 = vmatprep.subr.mxu0 0.0
  %1297 = vmatpush1.msra.mxu0 0.0
  %1298 = vmatprep.subr.mxu0 0.0
  %1299 = vmatpush1.msra.mxu0 0.0
  %1300 = vmatprep.subr.mxu0 0.0
  %1301 = vmatpush1.msra.mxu0 0.0
  %1302 = vmatprep.subr.mxu0 %v237
  %1303 = vmatpush1.msra.mxu0 %v236
  %1304 = vmatprep.subr.mxu0 %v235
  %1305 = vmatpush1.msra.mxu0 %v234
  %1306 = vmatprep.subr.mxu0 %v233
  %1307 = vmatpush1.msra.mxu0 %v232
  %1308 = vmatprep.subr.mxu0 %v231
  %1309 = vmatpush1.msra.mxu0 %v230
  %1310 = vmatprep.subr.mxu0 %v229
  %1311 = vmatpush1.msra.mxu0 %v228
  %1312 = vmatprep.subr.mxu0 %v227
  %1313 = vmatpush1.msra.mxu0 %v226
  %1314 = vmatprep.subr.mxu0 %v225
  %1315 = vmatpush1.msra.mxu0 %v224
  %1316 = vmatprep.subr.mxu0 %v223
  %1317 = vmatpush1.msra.mxu0 %v222
  %1318 = vmatprep.subr.mxu0 0.0
  %1319 = vmatpush2.msra.mxu0 0.0
  %1320 = vmatprep.subr.mxu0 0.0
  %1321 = vmatpush2.msra.mxu0 0.0
  %1322 = vmatprep.subr.mxu0 0.0
  %1323 = vmatpush2.msra.mxu0 0.0
  %1324 = vmatprep.subr.mxu0 0.0
  %1325 = vmatpush2.msra.mxu0 0.0
  %1326 = vmatprep.subr.mxu0 0.0
  %1327 = vmatpush2.msra.mxu0 0.0
  %1328 = vmatprep.subr.mxu0 0.0
  %1329 = vmatpush2.msra.mxu0 0.0
  %1330 = vmatprep.subr.mxu0 0.0
  %1331 = vmatpush2.msra.mxu0 0.0
  %1332 = vmatprep.subr.mxu0 0.0
  %1333 = vmatpush2.msra.mxu0 0.0
  %1334 = vmatprep.subr.mxu0 0.0
  %1335 = vmatpush2.msra.mxu0 0.0
  %1336 = vmatprep.subr.mxu0 0.0
  %1337 = vmatpush2.msra.mxu0 0.0
  %1338 = vmatprep.subr.mxu0 0.0
  %1339 = vmatpush2.msra.mxu0 0.0
  %1340 = vmatprep.subr.mxu0 0.0
  %1341 = vmatpush2.msra.mxu0 0.0
  %1342 = vmatprep.subr.mxu0 0.0
  %1343 = vmatpush2.msra.mxu0 0.0
  %1344 = vmatprep.subr.mxu0 0.0
  %1345 = vmatpush2.msra.mxu0 0.0
  %1346 = vmatprep.subr.mxu0 0.0
  %1347 = vmatpush2.msra.mxu0 0.0
  %1348 = vmatprep.subr.mxu0 0.0
  %1349 = vmatpush2.msra.mxu0 0.0
  %1350 = vmatprep.mubr.f32.mxu0 0.0
  %1351 = vmatmul.mubr.f32.gmra.mxu0 %v1284
  %v1352 = vpop.f32.mrf.mxu0
  %v1353 = vadd.f32 0.0, %v1352
  %v1354 = vpop.f32.mrf.mxu0
  %v1355 = vadd.f32 0.0, %v1354
  %1356 = vdwg.mxu0
  %v1357 = vadd.f32 %v212, %v1353
  %v1358 = vadd.f32 %v184, %v1355
  %v1359 = vmul.f32 %v1357, 0.5
  %v1360 = vtanh.pop %v1359
  %v1361 = vadd.f32 %v1360, 1.0
  %v1362 = vmul.f32 %v1361, 0.5
  %v1363 = vtanh.pop %v1357
  %v1364 = vmul.f32 %v1358, 0.5
  %v1365 = vtanh.pop %v1364
  %v1366 = vadd.f32 %v1365, 1.0
  %v1367 = vmul.f32 %v1366, 0.5
  %v1368 = vtanh.pop %v1358
  %v1369 = vmul.f32 %v1362, %v1239
  %1371 = vrot.lane.b32.xlu0 %v1363, 32
  %v1372 = vpop.permute.xlu0 %1371
  %v1374 = vmul.f32 %v1362, %v1372
  %1376 = vrot.lane.b32.xlu0 %v1374, 32
  %v1377 = vpop.permute.xlu0 %1376
  %v1379 = vadd.f32 %v1369, %v1377
  %v1380 = vtanh.pop %v1379
  %1382 = vrot.lane.b32.xlu0 %v1380, 32
  %v1383 = vpop.permute.xlu0 %1382
  %v1385 = vmul.f32 %v1362, %v1383
  %v1386 = vmul.f32 %v1367, %v1241
  %1388 = vrot.lane.b32.xlu0 %v1368, 32
  %v1389 = vpop.permute.xlu0 %1388
  %v1391 = vmul.f32 %v1367, %v1389
  %1393 = vrot.lane.b32.xlu0 %v1391, 32
  %v1394 = vpop.permute.xlu0 %1393
  %v1396 = vadd.f32 %v1386, %v1394
  %v1397 = vtanh.pop %v1396
  %1399 = vrot.lane.b32.xlu0 %v1397, 32
  %v1400 = vpop.permute.xlu0 %1399
  %v1402 = vmul.f32 %v1367, %v1400
  %v1403 = vsel %vm555, %v1385, %v1238
  %v1404 = vsel %vm555, %v1379, %v1239
  %v1405 = vsel %vm548, %v1402, %v1240
  %v1406 = vsel %vm548, %v1396, %v1241
  %vm1407 = vcmp.eq.s32.totalorder %v239, 6
  %vm1408 = vmand %vm543, %vm1407
  %v1409 = vsel %vm1408, 1, 0
  %1410 = vset.pattern.permute.xlu0 0
  %1411 = vperm.xlu0 %1410, %v1409
  %v1412 = vpop.permute.xlu0 %1411
  %vm1413 = vcmp.eq.s32.totalorder %v1412, 1
  %v1414 = vsel %vm1413, %v1385, %v1249
  %vm1415 = vcmp.eq.s32.totalorder %v241, 6
  %vm1416 = vmand %vm543, %vm1415
  %v1417 = vsel %vm1416, 1, 0
  %1418 = vset.pattern.permute.xlu0 0
  %1419 = vperm.xlu0 %1418, %v1417
  %v1420 = vpop.permute.xlu0 %1419
  %vm1421 = vcmp.eq.s32.totalorder %v1420, 1
  %v1422 = vsel %vm1421, %v1385, %v1257
  %vm1423 = vcmp.eq.s32.totalorder %v240, 1
  %vm1424 = vmand %vm542, %vm1423
  %v1425 = vsel %vm1424, 1, 0
  %1426 = vset.pattern.permute.xlu0 0
  %1427 = vperm.xlu0 %1426, %v1425
  %v1428 = vpop.permute.xlu0 %1427
  %vm1429 = vcmp.eq.s32.totalorder %v1428, 1
  %v1430 = vsel %vm1429, %v1402, %v1265
  %vm1431 = vcmp.eq.s32.totalorder %v242, 1
  %vm1432 = vmand %vm542, %vm1431
  %v1433 = vsel %vm1432, 1, 0
  %1434 = vset.pattern.permute.xlu0 0
  %1435 = vperm.xlu0 %1434, %v1433
  %v1436 = vpop.permute.xlu0 %1435
  %vm1437 = vcmp.eq.s32.totalorder %v1436, 1
  %v1438 = vsel %vm1437, %v1402, %v1273
  %1440 = vrot.lane.b32.xlu0 %v1403, 64
  %v1441 = vpop.permute.xlu0 %1440
  %1444 = vrot.lane.b32.xlu0 %v1405, 96
  %v1445 = vpop.permute.xlu0 %1444
  %v1447 = vsel %vm420, %v1441, %v1445
  %v1449 = vsel %vm243, %v1447, 0
  %1451 = vmatprep.subr.mxu0 0.0
  %1452 = vmatpush1.msra.mxu0 0.0
  %1453 = vmatprep.subr.mxu0 0.0
  %1454 = vmatpush1.msra.mxu0 0.0
  %1455 = vmatprep.subr.mxu0 0.0
  %1456 = vmatpush1.msra.mxu0 0.0
  %1457 = vmatprep.subr.mxu0 0.0
  %1458 = vmatpush1.msra.mxu0 0.0
  %1459 = vmatprep.subr.mxu0 0.0
  %1460 = vmatpush1.msra.mxu0 0.0
  %1461 = vmatprep.subr.mxu0 0.0
  %1462 = vmatpush1.msra.mxu0 0.0
  %1463 = vmatprep.subr.mxu0 0.0
  %1464 = vmatpush1.msra.mxu0 0.0
  %1465 = vmatprep.subr.mxu0 0.0
  %1466 = vmatpush1.msra.mxu0 0.0
  %1467 = vmatprep.subr.mxu0 %v237
  %1468 = vmatpush1.msra.mxu0 %v236
  %1469 = vmatprep.subr.mxu0 %v235
  %1470 = vmatpush1.msra.mxu0 %v234
  %1471 = vmatprep.subr.mxu0 %v233
  %1472 = vmatpush1.msra.mxu0 %v232
  %1473 = vmatprep.subr.mxu0 %v231
  %1474 = vmatpush1.msra.mxu0 %v230
  %1475 = vmatprep.subr.mxu0 %v229
  %1476 = vmatpush1.msra.mxu0 %v228
  %1477 = vmatprep.subr.mxu0 %v227
  %1478 = vmatpush1.msra.mxu0 %v226
  %1479 = vmatprep.subr.mxu0 %v225
  %1480 = vmatpush1.msra.mxu0 %v224
  %1481 = vmatprep.subr.mxu0 %v223
  %1482 = vmatpush1.msra.mxu0 %v222
  %1483 = vmatprep.subr.mxu0 0.0
  %1484 = vmatpush2.msra.mxu0 0.0
  %1485 = vmatprep.subr.mxu0 0.0
  %1486 = vmatpush2.msra.mxu0 0.0
  %1487 = vmatprep.subr.mxu0 0.0
  %1488 = vmatpush2.msra.mxu0 0.0
  %1489 = vmatprep.subr.mxu0 0.0
  %1490 = vmatpush2.msra.mxu0 0.0
  %1491 = vmatprep.subr.mxu0 0.0
  %1492 = vmatpush2.msra.mxu0 0.0
  %1493 = vmatprep.subr.mxu0 0.0
  %1494 = vmatpush2.msra.mxu0 0.0
  %1495 = vmatprep.subr.mxu0 0.0
  %1496 = vmatpush2.msra.mxu0 0.0
  %1497 = vmatprep.subr.mxu0 0.0
  %1498 = vmatpush2.msra.mxu0 0.0
  %1499 = vmatprep.subr.mxu0 0.0
  %1500 = vmatpush2.msra.mxu0 0.0
  %1501 = vmatprep.subr.mxu0 0.0
  %1502 = vmatpush2.msra.mxu0 0.0
  %1503 = vmatprep.subr.mxu0 0.0
  %1504 = vmatpush2.msra.mxu0 0.0
  %1505 = vmatprep.subr.mxu0 0.0
  %1506 = vmatpush2.msra.mxu0 0.0
  %1507 = vmatprep.subr.mxu0 0.0
  %1508 = vmatpush2.msra.mxu0 0.0
  %1509 = vmatprep.subr.mxu0 0.0
  %1510 = vmatpush2.msra.mxu0 0.0
  %1511 = vmatprep.subr.mxu0 0.0
  %1512 = vmatpush2.msra.mxu0 0.0
  %1513 = vmatprep.subr.mxu0 0.0
  %1514 = vmatpush2.msra.mxu0 0.0
  %1515 = vmatprep.mubr.f32.mxu0 0.0
  %1516 = vmatmul.mubr.f32.gmra.mxu0 %v1449
  %v1517 = vpop.f32.mrf.mxu0
  %v1518 = vadd.f32 0.0, %v1517
  %v1519 = vpop.f32.mrf.mxu0
  %v1520 = vadd.f32 0.0, %v1519
  %1521 = vdwg.mxu0
  %v1522 = vadd.f32 %v218, %v1518
  %v1523 = vadd.f32 %v178, %v1520
  %v1524 = vmul.f32 %v1522, 0.5
  %v1525 = vtanh.pop %v1524
  %v1526 = vadd.f32 %v1525, 1.0
  %v1527 = vmul.f32 %v1526, 0.5
  %v1528 = vtanh.pop %v1522
  %v1529 = vmul.f32 %v1523, 0.5
  %v1530 = vtanh.pop %v1529
  %v1531 = vadd.f32 %v1530, 1.0
  %v1532 = vmul.f32 %v1531, 0.5
  %v1533 = vtanh.pop %v1523
  %v1534 = vmul.f32 %v1527, %v1404
  %1536 = vrot.lane.b32.xlu0 %v1528, 32
  %v1537 = vpop.permute.xlu0 %1536
  %v1539 = vmul.f32 %v1527, %v1537
  %1541 = vrot.lane.b32.xlu0 %v1539, 32
  %v1542 = vpop.permute.xlu0 %1541
  %v1544 = vadd.f32 %v1534, %v1542
  %v1545 = vtanh.pop %v1544
  %1547 = vrot.lane.b32.xlu0 %v1545, 32
  %v1548 = vpop.permute.xlu0 %1547
  %v1550 = vmul.f32 %v1527, %v1548
  %v1551 = vmul.f32 %v1532, %v1406
  %1553 = vrot.lane.b32.xlu0 %v1533, 32
  %v1554 = vpop.permute.xlu0 %1553
  %v1556 = vmul.f32 %v1532, %v1554
  %1558 = vrot.lane.b32.xlu0 %v1556, 32
  %v1559 = vpop.permute.xlu0 %1558
  %v1561 = vadd.f32 %v1551, %v1559
  %v1562 = vtanh.pop %v1561
  %1564 = vrot.lane.b32.xlu0 %v1562, 32
  %v1565 = vpop.permute.xlu0 %1564
  %v1567 = vmul.f32 %v1532, %v1565
  %vm1568 = vcmp.eq.s32.totalorder %v239, 7
  %vm1569 = vmand %vm365, %vm1568
  %v1570 = vsel %vm1569, 1, 0
  %1571 = vset.pattern.permute.xlu0 0
  %1572 = vperm.xlu0 %1571, %v1570
  %v1573 = vpop.permute.xlu0 %1572
  %vm1574 = vcmp.eq.s32.totalorder %v1573, 1
  %v1575 = vsel %vm1574, %v1550, %v1414
  %vm1576 = vcmp.eq.s32.totalorder %v241, 7
  %vm1577 = vmand %vm365, %vm1576
  %v1578 = vsel %vm1577, 1, 0
  %1579 = vset.pattern.permute.xlu0 0
  %1580 = vperm.xlu0 %1579, %v1578
  %v1581 = vpop.permute.xlu0 %1580
  %vm1582 = vcmp.eq.s32.totalorder %v1581, 1
  %v1583 = vsel %vm1582, %v1550, %v1422
  %vm1584 = vcmp.eq.s32.totalorder %v240, 0
  %vm1585 = vmand %vm364, %vm1584
  %v1586 = vsel %vm1585, 1, 0
  %1587 = vset.pattern.permute.xlu0 0
  %1588 = vperm.xlu0 %1587, %v1586
  %v1589 = vpop.permute.xlu0 %1588
  %vm1590 = vcmp.eq.s32.totalorder %v1589, 1
  %v1591 = vsel %vm1590, %v1567, %v1430
  %vm1592 = vcmp.eq.s32.totalorder %v242, 0
  %vm1593 = vmand %vm364, %vm1592
  %v1594 = vsel %vm1593, 1, 0
  %1595 = vset.pattern.permute.xlu0 0
  %1596 = vperm.xlu0 %1595, %v1594
  %v1597 = vpop.permute.xlu0 %1596
  %vm1598 = vcmp.eq.s32.totalorder %v1597, 1
  %v1599 = vsel %vm1598, %v1567, %v1438
  %1601 = vrot.lane.b32.xlu0 %v1591, 64
  %v1602 = vpop.permute.xlu0 %1601
  %1605 = vrot.lane.b32.xlu0 %v1575, 96
  %v1606 = vpop.permute.xlu0 %1605
  %1609 = vrot.lane.b32.xlu0 %v1583, 32
  %v1610 = vpop.permute.xlu0 %1609
  %v1612 = vsel %vm420, %v1602, %v1606
  %v1613 = vsel %vm243, %v1612, %v1599
  %vm1614 = vcmask 785408
  %v1615 = vsel %vm1614, %v1613, %v1610
  %v1616 = vld [vmem:[%s9] sm:$0xff]
  %v1617 = vld [vmem:[%s9 + $0x8] sm:$0xff]
  %v1618 = vld [vmem:[%s9 + $0x10] sm:$0xff]
  %v1619 = vld [vmem:[%s9 + $0x18] sm:$0xff]
  %v1620 = vld [vmem:[%s9 + $0x20] sm:$0xff]
  %v1621 = vld [vmem:[%s9 + $0x28] sm:$0xff]
  %v1622 = vld [vmem:[%s9 + $0x30] sm:$0xff]
  %v1623 = vld [vmem:[%s9 + $0x38] sm:$0xff]
  %v1624 = vld [vmem:[%s9 + $0x40] sm:$0xff]
  %v1625 = vld [vmem:[%s9 + $0x48] sm:$0xff]
  %v1626 = vld [vmem:[%s9 + $0x50] sm:$0xff]
  %v1627 = vld [vmem:[%s9 + $0x58] sm:$0xff]
  %v1628 = vld [vmem:[%s9 + $0x60] sm:$0xff]
  %v1629 = vld [vmem:[%s9 + $0x68] sm:$0xff]
  %v1630 = vld [vmem:[%s9 + $0x70] sm:$0xff]
  %v1631 = vld [vmem:[%s9 + $0x78] sm:$0xff]
  %v1632 = vld [vmem:[%s10] sm:$0x1]
  %v1634 = vlaneseq
  %v1635 = vshrl.u32 %v1634, 7
  %v1636 = vsub.s32 0, %v1635
  %v1637 = vrot.slane %v1632, %v1636
  %1639 = vmatprep.subr.mxu0 0.0
  %1640 = vmatpush1.msra.mxu0 %v1631
  %1641 = vmatprep.subr.mxu0 0.0
  %1642 = vmatpush1.msra.mxu0 %v1630
  %1643 = vmatprep.subr.mxu0 0.0
  %1644 = vmatpush1.msra.mxu0 %v1629
  %1645 = vmatprep.subr.mxu0 0.0
  %1646 = vmatpush1.msra.mxu0 %v1628
  %1647 = vmatprep.subr.mxu0 0.0
  %1648 = vmatpush1.msra.mxu0 %v1627
  %1649 = vmatprep.subr.mxu0 0.0
  %1650 = vmatpush1.msra.mxu0 %v1626
  %1651 = vmatprep.subr.mxu0 0.0
  %1652 = vmatpush1.msra.mxu0 %v1625
  %1653 = vmatprep.subr.mxu0 0.0
  %1654 = vmatpush1.msra.mxu0 %v1624
  %1655 = vmatprep.subr.mxu0 0.0
  %1656 = vmatpush1.msra.mxu0 %v1623
  %1657 = vmatprep.subr.mxu0 0.0
  %1658 = vmatpush1.msra.mxu0 %v1622
  %1659 = vmatprep.subr.mxu0 0.0
  %1660 = vmatpush1.msra.mxu0 %v1621
  %1661 = vmatprep.subr.mxu0 0.0
  %1662 = vmatpush1.msra.mxu0 %v1620
  %1663 = vmatprep.subr.mxu0 0.0
  %1664 = vmatpush1.msra.mxu0 %v1619
  %1665 = vmatprep.subr.mxu0 0.0
  %1666 = vmatpush1.msra.mxu0 %v1618
  %1667 = vmatprep.subr.mxu0 0.0
  %1668 = vmatpush1.msra.mxu0 %v1617
  %1669 = vmatprep.subr.mxu0 0.0
  %1670 = vmatpush1.msra.mxu0 %v1616
  %1671 = vmatprep.subr.mxu0 0.0
  %1672 = vmatpush2.msra.mxu0 0.0
  %1673 = vmatprep.subr.mxu0 0.0
  %1674 = vmatpush2.msra.mxu0 0.0
  %1675 = vmatprep.subr.mxu0 0.0
  %1676 = vmatpush2.msra.mxu0 0.0
  %1677 = vmatprep.subr.mxu0 0.0
  %1678 = vmatpush2.msra.mxu0 0.0
  %1679 = vmatprep.subr.mxu0 0.0
  %1680 = vmatpush2.msra.mxu0 0.0
  %1681 = vmatprep.subr.mxu0 0.0
  %1682 = vmatpush2.msra.mxu0 0.0
  %1683 = vmatprep.subr.mxu0 0.0
  %1684 = vmatpush2.msra.mxu0 0.0
  %1685 = vmatprep.subr.mxu0 0.0
  %1686 = vmatpush2.msra.mxu0 0.0
  %1687 = vmatprep.subr.mxu0 0.0
  %1688 = vmatpush2.msra.mxu0 0.0
  %1689 = vmatprep.subr.mxu0 0.0
  %1690 = vmatpush2.msra.mxu0 0.0
  %1691 = vmatprep.subr.mxu0 0.0
  %1692 = vmatpush2.msra.mxu0 0.0
  %1693 = vmatprep.subr.mxu0 0.0
  %1694 = vmatpush2.msra.mxu0 0.0
  %1695 = vmatprep.subr.mxu0 0.0
  %1696 = vmatpush2.msra.mxu0 0.0
  %1697 = vmatprep.subr.mxu0 0.0
  %1698 = vmatpush2.msra.mxu0 0.0
  %1699 = vmatprep.subr.mxu0 0.0
  %1700 = vmatpush2.msra.mxu0 0.0
  %1701 = vmatprep.subr.mxu0 0.0
  %1702 = vmatpush2.msra.mxu0 0.0
  %1703 = vmatprep.mubr.f32.mxu0 0.0
  %1704 = vmatmul.mubr.f32.gmra.mxu0 %v1615
  %v1705 = vpop.f32.mrf.mxu0
  %v1706 = vadd.f32 %v1637, %v1705
  %v1707 = vpop.f32.mrf.mxu0
  %1708 = vdwg.mxu0
  %v1709 = vtanh.pop %v1706
  %v1710 = vld [vmem:[%s11] sm:$0xff]
  %v1711 = vld [vmem:[%s11 + $0x8] sm:$0xff]
  %v1712 = vld [vmem:[%s11 + $0x10] sm:$0xff]
  %v1713 = vld [vmem:[%s11 + $0x18] sm:$0xff]
  %v1714 = vld [vmem:[%s12] sm:$0x1]
  %v1716 = vlaneseq
  %v1717 = vshrl.u32 %v1716, 7
  %v1718 = vsub.s32 0, %v1717
  %v1719 = vrot.slane %v1714, %v1718
  %v1722 = vsel %vm420, %v1709, 0
  %1724 = vmatprep.subr.mxu0 0.0
  %1725 = vmatpush1.msra.mxu0 0.0
  %1726 = vmatprep.subr.mxu0 0.0
  %1727 = vmatpush1.msra.mxu0 0.0
  %1728 = vmatprep.subr.mxu0 0.0
  %1729 = vmatpush1.msra.mxu0 0.0
  %1730 = vmatprep.subr.mxu0 0.0
  %1731 = vmatpush1.msra.mxu0 0.0
  %1732 = vmatprep.subr.mxu0 0.0
  %1733 = vmatpush1.msra.mxu0 0.0
  %1734 = vmatprep.subr.mxu0 0.0
  %1735 = vmatpush1.msra.mxu0 0.0
  %1736 = vmatprep.subr.mxu0 0.0
  %1737 = vmatpush1.msra.mxu0 0.0
  %1738 = vmatprep.subr.mxu0 0.0
  %1739 = vmatpush1.msra.mxu0 0.0
  %1740 = vmatprep.subr.mxu0 0.0
  %1741 = vmatpush1.msra.mxu0 0.0
  %1742 = vmatprep.subr.mxu0 0.0
  %1743 = vmatpush1.msra.mxu0 0.0
  %1744 = vmatprep.subr.mxu0 0.0
  %1745 = vmatpush1.msra.mxu0 0.0
  %1746 = vmatprep.subr.mxu0 0.0
  %1747 = vmatpush1.msra.mxu0 0.0
  %1748 = vmatprep.subr.mxu0 0.0
  %1749 = vmatpush1.msra.mxu0 %v1713
  %1750 = vmatprep.subr.mxu0 0.0
  %1751 = vmatpush1.msra.mxu0 %v1712
  %1752 = vmatprep.subr.mxu0 0.0
  %1753 = vmatpush1.msra.mxu0 %v1711
  %1754 = vmatprep.subr.mxu0 0.0
  %1755 = vmatpush1.msra.mxu0 %v1710
  %1756 = vmatprep.subr.mxu0 0.0
  %1757 = vmatpush2.msra.mxu0 0.0
  %1758 = vmatprep.subr.mxu0 0.0
  %1759 = vmatpush2.msra.mxu0 0.0
  %1760 = vmatprep.subr.mxu0 0.0
  %1761 = vmatpush2.msra.mxu0 0.0
  %1762 = vmatprep.subr.mxu0 0.0
  %1763 = vmatpush2.msra.mxu0 0.0
  %1764 = vmatprep.subr.mxu0 0.0
  %1765 = vmatpush2.msra.mxu0 0.0
  %1766 = vmatprep.subr.mxu0 0.0
  %1767 = vmatpush2.msra.mxu0 0.0
  %1768 = vmatprep.subr.mxu0 0.0
  %1769 = vmatpush2.msra.mxu0 0.0
  %1770 = vmatprep.subr.mxu0 0.0
  %1771 = vmatpush2.msra.mxu0 0.0
  %1772 = vmatprep.subr.mxu0 0.0
  %1773 = vmatpush2.msra.mxu0 0.0
  %1774 = vmatprep.subr.mxu0 0.0
  %1775 = vmatpush2.msra.mxu0 0.0
  %1776 = vmatprep.subr.mxu0 0.0
  %1777 = vmatpush2.msra.mxu0 0.0
  %1778 = vmatprep.subr.mxu0 0.0
  %1779 = vmatpush2.msra.mxu0 0.0
  %1780 = vmatprep.subr.mxu0 0.0
  %1781 = vmatpush2.msra.mxu0 0.0
  %1782 = vmatprep.subr.mxu0 0.0
  %1783 = vmatpush2.msra.mxu0 0.0
  %1784 = vmatprep.subr.mxu0 0.0
  %1785 = vmatpush2.msra.mxu0 0.0
  %1786 = vmatprep.subr.mxu0 0.0
  %1787 = vmatpush2.msra.mxu0 0.0
  %1788 = vmatprep.mubr.f32.mxu0 0.0
  %1789 = vmatmul.mubr.f32.gmra.mxu0 %v1722
  %v1790 = vpop.f32.mrf.mxu0
  %v1791 = vadd.f32 %v1719, %v1790
  %v1792 = vpop.f32.mrf.mxu0
  %1793 = vdwg.mxu0
  %vm1794 = vcmask 31744
  %1795 = vst.msk [vmem:[%s13] sm:$0xff] %vm1794, %v1791
  %v1796 = vsel %vm1794, %v1791, -inf
  %1797 = vmax.xlane.f32.xlu0 %v1796
  %v1798 = vpop.xlane.xlu0 %1797
  %v1799 = vsub.f32 %v1791, %v1798
  %v1800 = vmul.f32 %v1799, 1.442695
  %v1801 = vpow.pop %v1800
  %v1802 = vsel %vm1794, %v1801, 0.0
  %1803 = vadd.xlane.f32.xlu0 %v1802
  %v1804 = vpop.xlane.xlu0 %1803
  %v1805 = vrcp.pop %v1804
  %v1806 = vmul.f32 %v1804, %v1805
  %v1807 = vsub.f32 2.0, %v1806
  %v1808 = vmul.f32 %v1805, %v1807
  %v1809 = vmul.f32 %v1801, %v1808
  %1810 = vst.msk [vmem:[%s14] sm:$0xff] %vm1794, %v1809
  // Predicated region
  $region54: #{bilstm_forward.1} parent=0 // pred_check
    _
  $region55: #{bilstm_forward.1} parent=0 // pred_check_branch
    %1812 = sbr.rel (0) target = $region57
  $region56: #{bilstm_forward.1} parent=0 // pred_region
    _
  $region57: #{bilstm_forward.1} parent=0 // pred_fallthru
    _
  // Predicated region
  $region58: #{bilstm_forward.1} parent=0 // pred_check
    _
  $region59: #{bilstm_forward.1} parent=0 // pred_check_branch
    %1814 = sbr.rel (0) target = $region61
  $region60: #{bilstm_forward.1} parent=0 // pred_region
    _
  $region61: #{bilstm_forward.1} parent=0 // pred_fallthru
    _
  // Predicated region
  $region62: #{bilstm_forward.1} parent=0 // pred_check
    _
  $region63: #{bilstm_forward.1} parent=0 // pred_check_branch
    %1816 = sbr.rel (0) target = $region65
  $region64: #{bilstm_forward.1} parent=0 // pred_region
    _
  $region65: #{bilstm_forward.1} parent=0 // pred_fallthru
    _
  // Predicated region
  $region66: #{bilstm_forward.1} parent=0 // pred_check
    _
  $region67: #{bilstm_forward.1} parent=0 // pred_check_branch
    %1818 = sbr.rel (0) target = $region69
  $region68: #{bilstm_forward.1} parent=0 // pred_region
    _
  $region69: #{bilstm_forward.1} parent=0 // pred_fallthru
    _

</llo_original>
